<compile_context>
chip_gen: v7x
topology: tpu7x:2x2x1
jax: 0.10.0
libtpu: 0.0.40
codegen_flags: <defaults>
</compile_context>

<pallas_src>
import functools

import jax
import jax.numpy as jnp
from jax import lax
from jax.experimental import pallas as pl
from jax.experimental.pallas import tpu as pltpu


# ----------------------------- Pallas kernel ------------------------------ #

def _hamiltonian_kernel(x_ref, masks_ref, k1a_ref, k1b_ref, k2a_ref, k2b_ref,
                        b1_ref, b2_ref, out_ref, a_buf,
                        *, n_blocks, h, W, HW, b_tile, c2, act, mm_dtype):
    """Full n_blocks leapfrog integration for one batch tile.

    x_ref    : (b_tile, nf, HW) input tile.
    masks_ref: (9, L) f32 boundary masks, L = b_tile*HW, tap order (dh, dw).
    k*_ref   : (n_blocks, c2, 9*c2) fused-tap conv weights (mm_dtype).
    b*_ref   : (n_blocks, c2, 1) f32 biases.
    out_ref  : (b_tile, nf, HW) output tile.
    a_buf    : VMEM scratch (9*c2, L) f32 -- fused conv matmul operand.
    """
    L = b_tile * HW
    masks = masks_ref[...]                                     # (9, L) f32

    # Load the state in channels-first, flattened-spatial form: (c2, L).
    if b_tile == 1:
        y = x_ref[0, :c2, :].astype(jnp.float32)
        z = x_ref[0, c2:, :].astype(jnp.float32)
    else:
        y = jnp.transpose(x_ref[:, :c2, :], (1, 0, 2)).reshape(c2, L)
        y = y.astype(jnp.float32)
        z = jnp.transpose(x_ref[:, c2:, :], (1, 0, 2)).reshape(c2, L)
        z = z.astype(jnp.float32)

    def conv3x3(state, w_cat):
        # Assemble the (9*c2, L) operand: tap t = border-masked, rolled copy of
        # the state.  Contraction index layout = t*c2 + cin, matching w_cat.
        t = 0
        for dh in (-1, 0, 1):
            for dw in (-1, 0, 1):
                s = dh * W + dw
                xt = state if s == 0 else pltpu.roll(state, shift=(-s) % L, axis=1)
                if not (dh == 0 and dw == 0):
                    xt = xt * masks[t:t + 1, :]
                a_buf[t * c2:(t + 1) * c2, :] = xt
                t += 1
        a = a_buf[...].astype(mm_dtype)                        # (9*c2, L)
        return lax.dot_general(w_cat, a, (((1,), (0,)), ((), ())),
                               preferred_element_type=jnp.float32)

    def block_body(j, carry):
        yj, zj = carry
        u = act(conv3x3(zj, k1a_ref[j]) + b1_ref[j])           # (c2, L) f32
        yj = yj + h * conv3x3(u, k1b_ref[j])
        v = act(conv3x3(yj, k2a_ref[j]) + b2_ref[j])
        zj = zj - h * conv3x3(v, k2b_ref[j])
        return yj, zj

    y, z = lax.fori_loop(0, n_blocks, block_body, (y, z))

    if b_tile == 1:
        out_ref[0, :c2, :] = y.astype(out_ref.dtype)
        out_ref[0, c2:, :] = z.astype(out_ref.dtype)
    else:
        out_ref[:, :c2, :] = jnp.transpose(
            y.reshape(c2, b_tile, HW), (1, 0, 2)).astype(out_ref.dtype)
        out_ref[:, c2:, :] = jnp.transpose(
            z.reshape(c2, b_tile, HW), (1, 0, 2)).astype(out_ref.dtype)


# ------------------------------ JAX wrapper -------------------------------- #

def _act_fn(name):
    if name == 'ReLU':
        return lambda x: jnp.maximum(x, 0.0)
    if name == 'Tanh':
        return jnp.tanh
    raise ValueError('Unknown Activation Function')


def _boundary_masks(H, W, b_tile):
    """(9, b_tile*H*W) f32 validity masks, tap order (dh, dw) row-major."""
    ii = jnp.arange(H)[:, None]
    jj = jnp.arange(W)[None, :]
    rows = []
    for dh in (-1, 0, 1):
        for dw in (-1, 0, 1):
            valid = ((ii + dh >= 0) & (ii + dh < H) &
                     (jj + dw >= 0) & (jj + dw < W))
            rows.append(valid.reshape(-1))
    m = jnp.stack(rows, 0).astype(jnp.float32)                 # (9, H*W)
    return jnp.tile(m, (1, b_tile))                            # (9, b_tile*H*W)


def _pick_b_tile(N, HW, nf):
    """Largest batch tile keeping >=2 grid steps (megacore) and small VMEM."""
    best = 1
    for b in range(1, N + 1):
        if N % b:
            continue
        if N >= 2 and N // b < 2:
            continue
        if (9 * (nf // 2) + 8 * nf) * b * HW * 4 > (6 << 20):
            continue
        best = b
    return best


def _full_spec(shape):
    nd = len(shape)
    return pl.BlockSpec(shape, lambda n, _nd=nd: (0,) * _nd)


def two_layer_hamiltonian_forward(Y0_nchw, K1, K2, b1, b2, *, h, n_blocks,
                                  act_name='ReLU', mm_dtype=jnp.bfloat16,
                                  b_tile=None):
    """Pallas implementation of TwoLayerHamiltonian.forward (NCHW in/out).

    Y0_nchw : (N, nf, H, W)                       input, like the PyTorch module
    K1, K2  : (nf/2, nf/2, ks, ks, n_blocks)      OIHW weights per block
    b1, b2  : (nf/2, 1, n_blocks)                 biases
    """
    N, nf, H, W = Y0_nchw.shape
    c2 = nf // 2
    ks = K1.shape[2]
    assert ks == 3, "kernel implemented for 3x3 convolutions (padding=1)"
    assert nf % 2 == 0
    HW = H * W
    if b_tile is None:
        b_tile = _pick_b_tile(N, HW, nf)
    assert N % b_tile == 0
    L = b_tile * HW

    # NCHW -> (N, nf, H*W): lane-dense last dim, contiguous reshape (no copy).
    x = Y0_nchw.reshape(N, nf, HW)

    # Fused-tap weights: w[j, o, (kh*3+kw)*c2 + i]
    #   first conv  uses K_j           -> K[o, i, kh, kw, j]
    #   second conv uses K_j^T(0,1)    -> K[i, o, kh, kw, j]   (plain conv, no flip)
    w1a = jnp.transpose(K1, (4, 0, 2, 3, 1)).reshape(n_blocks, c2, 9 * c2).astype(mm_dtype)
    w1b = jnp.transpose(K1, (4, 1, 2, 3, 0)).reshape(n_blocks, c2, 9 * c2).astype(mm_dtype)
    w2a = jnp.transpose(K2, (4, 0, 2, 3, 1)).reshape(n_blocks, c2, 9 * c2).astype(mm_dtype)
    w2b = jnp.transpose(K2, (4, 1, 2, 3, 0)).reshape(n_blocks, c2, 9 * c2).astype(mm_dtype)
    b1r = jnp.transpose(b1[:, 0, :], (1, 0)).reshape(n_blocks, c2, 1).astype(jnp.float32)
    b2r = jnp.transpose(b2[:, 0, :], (1, 0)).reshape(n_blocks, c2, 1).astype(jnp.float32)
    masks = _boundary_masks(H, W, b_tile)

    kernel = functools.partial(
        _hamiltonian_kernel, n_blocks=n_blocks, h=float(h), W=W, HW=HW,
        b_tile=b_tile, c2=c2, act=_act_fn(act_name), mm_dtype=mm_dtype)

    # Explicit VMEM budget: double-buffered I/O tiles + constants + scratch +
    # working-set headroom (keeps us under the v7x 64 MiB physical ceiling).
    itemsize = Y0_nchw.dtype.itemsize
    mm_itemsize = jnp.dtype(mm_dtype).itemsize
    footprint = (
        2 * 2 * b_tile * nf * HW * itemsize            # in/out tiles (double-buffered)
        + 2 * 9 * L * 4                                # masks
        + 2 * 4 * n_blocks * c2 * 9 * c2 * mm_itemsize # fused weights
        + 2 * 2 * n_blocks * c2 * 128 * 4              # biases (lane-padded)
        + 9 * c2 * L * 4                               # fused-operand scratch
        + 16 * c2 * L * 4                              # state + intermediates headroom
    )
    vmem_limit = int(min(48 << 20, max(8 << 20, 4 * footprint)))

    out = pl.pallas_call(
        kernel,
        out_shape=jax.ShapeDtypeStruct((N, nf, HW), Y0_nchw.dtype),
        grid=(N // b_tile,),
        in_specs=[
            pl.BlockSpec((b_tile, nf, HW), lambda n: (n, 0, 0)),   # Y0 tile
            _full_spec((9, L)),                                    # boundary masks
            _full_spec((n_blocks, c2, 9 * c2)),                    # K1 fused
            _full_spec((n_blocks, c2, 9 * c2)),                    # K1^T fused
            _full_spec((n_blocks, c2, 9 * c2)),                    # K2 fused
            _full_spec((n_blocks, c2, 9 * c2)),                    # K2^T fused
            _full_spec((n_blocks, c2, 1)),                         # b1
            _full_spec((n_blocks, c2, 1)),                         # b2
        ],
        out_specs=pl.BlockSpec((b_tile, nf, HW), lambda n: (n, 0, 0)),
        scratch_shapes=[pltpu.VMEM((9 * c2, L), jnp.float32)],
        compiler_params=pltpu.CompilerParams(
            dimension_semantics=("parallel",),
            vmem_limit_bytes=vmem_limit),
    )(x, masks, w1a, w1b, w2a, w2b, b1r, b2r)

    return out.reshape(N, nf, H, W)


# -------------------- deterministic parameter init ------------------------- #

def init_params(key, nf, ks, n_blocks):
    # Synthetic deterministic stand-in for init_K_and_b (same shapes).
    c2 = nf // 2
    k1, k2, k3, k4 = jax.random.split(key, 4)
    K1 = 0.1 * jax.random.normal(k1, (c2, c2, ks, ks, n_blocks), jnp.float32)
    K2 = 0.1 * jax.random.normal(k2, (c2, c2, ks, ks, n_blocks), jnp.float32)
    b1 = 0.01 * jax.random.normal(k3, (c2, 1, n_blocks), jnp.float32)
    b2 = 0.01 * jax.random.normal(k4, (c2, 1, n_blocks), jnp.float32)
    return K1, K2, b1, b2


# --------------------------- pure-JAX reference ----------------------------- #

def reference_forward(Y0, K1, K2, b1, b2, h, n_blocks, act_name):
    act = _act_fn(act_name)
    c2 = Y0.shape[1] // 2
    Y, Z = Y0[:, :c2], Y0[:, c2:]
    dn = ('NCHW', 'OIHW', 'NCHW')

    def conv(x, w, b=None):
        o = lax.conv_general_dilated(x, w, (1, 1), [(1, 1), (1, 1)],
                                     dimension_numbers=dn)
        return o if b is None else o + b[None, :, None, None]

    for j in range(n_blocks):
        K1j, K2j = K1[:, :, :, :, j], K2[:, :, :, :, j]
        Y = Y + h * conv(act(conv(Z, K1j, b1[:, 0, j])),
                         jnp.transpose(K1j, (1, 0, 2, 3)))
        Z = Z - h * conv(act(conv(Y, K2j, b2[:, 0, j])),
                         jnp.transpose(K2j, (1, 0, 2, 3)))
    return jnp.concatenate([Y, Z], axis=1)


# --------------------------------- main ------------------------------------ #

if __name__ == "__main__":
    key = jax.random.PRNGKey(0)
    N, nf, H, W = 2, 8, 16, 16           # nf must be even
    n_blocks, ks, h = 4, 3, 0.1
    act_name = 'ReLU'

    kx, kp = jax.random.split(key)
    x = jax.random.normal(kx, (N, nf, H, W), jnp.float32)
    K1, K2, b1, b2 = init_params(kp, nf, ks, n_blocks)

    ref = reference_forward(x, K1, K2, b1, b2, h, n_blocks, act_name)

    # Tight check with f32 MXU operands.
    out_f32 = two_layer_hamiltonian_forward(
        x, K1, K2, b1, b2, h=h, n_blocks=n_blocks, act_name=act_name,
        mm_dtype=jnp.float32)
    out_f32 = jax.block_until_ready(out_f32)
    err_f32 = float(jnp.max(jnp.abs(out_f32 - ref)))

    # Default perf path: bf16 MXU operands, f32 accumulation/state.
    out_bf16 = two_layer_hamiltonian_forward(
        x, K1, K2, b1, b2, h=h, n_blocks=n_blocks, act_name=act_name)
    out_bf16 = jax.block_until_ready(out_bf16)
    err_bf16 = float(jnp.max(jnp.abs(out_bf16 - ref)))

    ok = (out_f32.shape == (N, nf, H, W) and out_f32.dtype == jnp.float32
          and err_f32 < 1e-4 and err_bf16 < 5e-2)
    if ok:
        print("KERNEL_OK")
    else:
        print(f"MISMATCH err_f32={err_f32} err_bf16={err_bf16}")
</pallas_src>

<mosaic_0001>
module attributes {stable_mosaic.version = 11 : i64} {
  func.func @_hamiltonian_kernel(%arg0: i32, %arg1: memref<1x8x256xf32, #tpu.memory_space<vmem>>, %arg2: memref<9x256xf32, #tpu.memory_space<vmem>>, %arg3: memref<4x4x36xf32, #tpu.memory_space<vmem>>, %arg4: memref<4x4x36xf32, #tpu.memory_space<vmem>>, %arg5: memref<4x4x36xf32, #tpu.memory_space<vmem>>, %arg6: memref<4x4x36xf32, #tpu.memory_space<vmem>>, %arg7: memref<4x4x1xf32, #tpu.memory_space<vmem>>, %arg8: memref<4x4x1xf32, #tpu.memory_space<vmem>>, %arg9: memref<1x8x256xf32, #tpu.memory_space<vmem>>, %arg10: memref<36x256xf32, #tpu.memory_space<vmem>>) attributes {dimension_semantics = [#tpu.dimension_semantics<parallel>], iteration_bounds = array<i64: 2>, scalar_prefetch = 0 : i64, scratch_operands = 1 : i64, tpu.core_type = #tpu.core_type<tc>, window_params = [{transform_indices = @transform_0, window_bounds = array<i64: 1, 8, 256>}, {pipeline_mode = #tpu.pipeline_mode<synchronous>, transform_indices = @transform_1, window_bounds = array<i64: 9, 256>}, {pipeline_mode = #tpu.pipeline_mode<synchronous>, transform_indices = @transform_2, window_bounds = array<i64: 4, 4, 36>}, {pipeline_mode = #tpu.pipeline_mode<synchronous>, transform_indices = @transform_3, window_bounds = array<i64: 4, 4, 36>}, {pipeline_mode = #tpu.pipeline_mode<synchronous>, transform_indices = @transform_4, window_bounds = array<i64: 4, 4, 36>}, {pipeline_mode = #tpu.pipeline_mode<synchronous>, transform_indices = @transform_5, window_bounds = array<i64: 4, 4, 36>}, {pipeline_mode = #tpu.pipeline_mode<synchronous>, transform_indices = @transform_6, window_bounds = array<i64: 4, 4, 1>}, {pipeline_mode = #tpu.pipeline_mode<synchronous>, transform_indices = @transform_7, window_bounds = array<i64: 4, 4, 1>}, {transform_indices = @transform_8, window_bounds = array<i64: 1, 8, 256>}]} {
    %c0 = arith.constant 0 : index
    %c0_0 = arith.constant 0 : index
    %0 = vector.load %arg2[%c0, %c0_0] : memref<9x256xf32, #tpu.memory_space<vmem>>, vector<9x256xf32>
    %c0_1 = arith.constant 0 : index
    %c0_2 = arith.constant 0 : index
    %c0_3 = arith.constant 0 : index
    %1 = vector.load %arg1[%c0_1, %c0_2, %c0_3] : memref<1x8x256xf32, #tpu.memory_space<vmem>>, vector<1x4x256xf32>
    %2 = vector.shape_cast %1 : vector<1x4x256xf32> to vector<4x256xf32>
    %c0_4 = arith.constant 0 : index
    %c4 = arith.constant 4 : index
    %c0_5 = arith.constant 0 : index
    %3 = vector.load %arg1[%c0_4, %c4, %c0_5] : memref<1x8x256xf32, #tpu.memory_space<vmem>>, vector<1x4x256xf32>
    %4 = vector.shape_cast %3 : vector<1x4x256xf32> to vector<4x256xf32>
    %c0_i32 = arith.constant 0 : i32
    %c4_i32 = arith.constant 4 : i32
    %5 = arith.addi %c0_i32, %c4_i32 : i32
    %c1_i32 = arith.constant 1 : i32
    %6:2 = scf.for %arg11 = %c0_i32 to %5 step %c1_i32 iter_args(%arg12 = %2, %arg13 = %4) -> (vector<4x256xf32>, vector<4x256xf32>)  : i32 {
      %13 = arith.index_cast %arg11 : i32 to index
      %c0_13 = arith.constant 0 : index
      %c0_14 = arith.constant 0 : index
      %14 = vector.load %arg3[%13, %c0_13, %c0_14] : memref<4x4x36xf32, #tpu.memory_space<vmem>>, vector<1x4x36xf32>
      %15 = vector.shape_cast %14 : vector<1x4x36xf32> to vector<4x36xf32>
      %c17_i32 = arith.constant 17 : i32
      %16 = tpu.dynamic_rotate %arg13 by %c17_i32 dim 1 : vector<4x256xf32>, i32 -> vector<4x256xf32>
      %17 = vector.extract_strided_slice %0 {offsets = [0, 0], sizes = [1, 256], strides = [1, 1]} : vector<9x256xf32> to vector<1x256xf32>
      %18 = vector.broadcast %17 : vector<1x256xf32> to vector<4x256xf32>
      %19 = arith.mulf %16, %18 : vector<4x256xf32>
      %c0_15 = arith.constant 0 : index
      %c0_16 = arith.constant 0 : index
      %20 = vector.load %arg10[%c0_15, %c0_16] : memref<36x256xf32, #tpu.memory_space<vmem>>, vector<4x256xf32>
      tpu.vector_store %arg10[%c0_15, %c0_16], %19 {strides = array<i32>} : memref<36x256xf32, #tpu.memory_space<vmem>>, vector<4x256xf32>,
      %c16_i32 = arith.constant 16 : i32
      %21 = tpu.dynamic_rotate %arg13 by %c16_i32 dim 1 : vector<4x256xf32>, i32 -> vector<4x256xf32>
      %22 = vector.extract_strided_slice %0 {offsets = [1, 0], sizes = [1, 256], strides = [1, 1]} : vector<9x256xf32> to vector<1x256xf32>
      %23 = vector.broadcast %22 : vector<1x256xf32> to vector<4x256xf32>
      %24 = arith.mulf %21, %23 : vector<4x256xf32>
      %c4_17 = arith.constant 4 : index
      %c0_18 = arith.constant 0 : index
      %25 = vector.load %arg10[%c4_17, %c0_18] : memref<36x256xf32, #tpu.memory_space<vmem>>, vector<4x256xf32>
      tpu.vector_store %arg10[%c4_17, %c0_18], %24 {strides = array<i32>} : memref<36x256xf32, #tpu.memory_space<vmem>>, vector<4x256xf32>,
      %c15_i32 = arith.constant 15 : i32
      %26 = tpu.dynamic_rotate %arg13 by %c15_i32 dim 1 : vector<4x256xf32>, i32 -> vector<4x256xf32>
      %27 = vector.extract_strided_slice %0 {offsets = [2, 0], sizes = [1, 256], strides = [1, 1]} : vector<9x256xf32> to vector<1x256xf32>
      %28 = vector.broadcast %27 : vector<1x256xf32> to vector<4x256xf32>
      %29 = arith.mulf %26, %28 : vector<4x256xf32>
      %c8 = arith.constant 8 : index
      %c0_19 = arith.constant 0 : index
      %30 = vector.load %arg10[%c8, %c0_19] : memref<36x256xf32, #tpu.memory_space<vmem>>, vector<4x256xf32>
      tpu.vector_store %arg10[%c8, %c0_19], %29 {strides = array<i32>} : memref<36x256xf32, #tpu.memory_space<vmem>>, vector<4x256xf32>,
      %c1_i32_20 = arith.constant 1 : i32
      %31 = tpu.dynamic_rotate %arg13 by %c1_i32_20 dim 1 : vector<4x256xf32>, i32 -> vector<4x256xf32>
      %32 = vector.extract_strided_slice %0 {offsets = [3, 0], sizes = [1, 256], strides = [1, 1]} : vector<9x256xf32> to vector<1x256xf32>
      %33 = vector.broadcast %32 : vector<1x256xf32> to vector<4x256xf32>
      %34 = arith.mulf %31, %33 : vector<4x256xf32>
      %c12 = arith.constant 12 : index
      %c0_21 = arith.constant 0 : index
      %35 = vector.load %arg10[%c12, %c0_21] : memref<36x256xf32, #tpu.memory_space<vmem>>, vector<4x256xf32>
      tpu.vector_store %arg10[%c12, %c0_21], %34 {strides = array<i32>} : memref<36x256xf32, #tpu.memory_space<vmem>>, vector<4x256xf32>,
      %c16 = arith.constant 16 : index
      %c0_22 = arith.constant 0 : index
      %36 = vector.load %arg10[%c16, %c0_22] : memref<36x256xf32, #tpu.memory_space<vmem>>, vector<4x256xf32>
      tpu.vector_store %arg10[%c16, %c0_22], %arg13 {strides = array<i32>} : memref<36x256xf32, #tpu.memory_space<vmem>>, vector<4x256xf32>,
      %c255_i32 = arith.constant 255 : i32
      %37 = tpu.dynamic_rotate %arg13 by %c255_i32 dim 1 : vector<4x256xf32>, i32 -> vector<4x256xf32>
      %38 = vector.extract_strided_slice %0 {offsets = [5, 0], sizes = [1, 256], strides = [1, 1]} : vector<9x256xf32> to vector<1x256xf32>
      %39 = vector.broadcast %38 : vector<1x256xf32> to vector<4x256xf32>
      %40 = arith.mulf %37, %39 : vector<4x256xf32>
      %c20 = arith.constant 20 : index
      %c0_23 = arith.constant 0 : index
      %41 = vector.load %arg10[%c20, %c0_23] : memref<36x256xf32, #tpu.memory_space<vmem>>, vector<4x256xf32>
      tpu.vector_store %arg10[%c20, %c0_23], %40 {strides = array<i32>} : memref<36x256xf32, #tpu.memory_space<vmem>>, vector<4x256xf32>,
      %c241_i32 = arith.constant 241 : i32
      %42 = tpu.dynamic_rotate %arg13 by %c241_i32 dim 1 : vector<4x256xf32>, i32 -> vector<4x256xf32>
      %43 = vector.extract_strided_slice %0 {offsets = [6, 0], sizes = [1, 256], strides = [1, 1]} : vector<9x256xf32> to vector<1x256xf32>
      %44 = vector.broadcast %43 : vector<1x256xf32> to vector<4x256xf32>
      %45 = arith.mulf %42, %44 : vector<4x256xf32>
      %c24 = arith.constant 24 : index
      %c0_24 = arith.constant 0 : index
      %46 = vector.load %arg10[%c24, %c0_24] : memref<36x256xf32, #tpu.memory_space<vmem>>, vector<4x256xf32>
      tpu.vector_store %arg10[%c24, %c0_24], %45 {strides = array<i32>} : memref<36x256xf32, #tpu.memory_space<vmem>>, vector<4x256xf32>,
      %c240_i32 = arith.constant 240 : i32
      %47 = tpu.dynamic_rotate %arg13 by %c240_i32 dim 1 : vector<4x256xf32>, i32 -> vector<4x256xf32>
      %48 = vector.extract_strided_slice %0 {offsets = [7, 0], sizes = [1, 256], strides = [1, 1]} : vector<9x256xf32> to vector<1x256xf32>
      %49 = vector.broadcast %48 : vector<1x256xf32> to vector<4x256xf32>
      %50 = arith.mulf %47, %49 : vector<4x256xf32>
      %c28 = arith.constant 28 : index
      %c0_25 = arith.constant 0 : index
      %51 = vector.load %arg10[%c28, %c0_25] : memref<36x256xf32, #tpu.memory_space<vmem>>, vector<4x256xf32>
      tpu.vector_store %arg10[%c28, %c0_25], %50 {strides = array<i32>} : memref<36x256xf32, #tpu.memory_space<vmem>>, vector<4x256xf32>,
      %c239_i32 = arith.constant 239 : i32
      %52 = tpu.dynamic_rotate %arg13 by %c239_i32 dim 1 : vector<4x256xf32>, i32 -> vector<4x256xf32>
      %53 = vector.extract_strided_slice %0 {offsets = [8, 0], sizes = [1, 256], strides = [1, 1]} : vector<9x256xf32> to vector<1x256xf32>
      %54 = vector.broadcast %53 : vector<1x256xf32> to vector<4x256xf32>
      %55 = arith.mulf %52, %54 : vector<4x256xf32>
      %c32 = arith.constant 32 : index
      %c0_26 = arith.constant 0 : index
      %56 = vector.load %arg10[%c32, %c0_26] : memref<36x256xf32, #tpu.memory_space<vmem>>, vector<4x256xf32>
      tpu.vector_store %arg10[%c32, %c0_26], %55 {strides = array<i32>} : memref<36x256xf32, #tpu.memory_space<vmem>>, vector<4x256xf32>,
      %c0_27 = arith.constant 0 : index
      %c0_28 = arith.constant 0 : index
      %57 = vector.load %arg10[%c0_27, %c0_28] : memref<36x256xf32, #tpu.memory_space<vmem>>, vector<36x256xf32>
      %cst = arith.constant dense<0.000000e+00> : vector<4x256xf32>
      %58 = tpu.matmul %15, %57, %cst {dimension_numbers = #tpu.dot_dimension_numbers<[1], [0], [0], [1], [0, 0, 1, 1], [], []>} : vector<4x36xf32>, vector<36x256xf32>, vector<4x256xf32> -> vector<4x256xf32>
      %59 = arith.index_cast %arg11 : i32 to index
      %c0_29 = arith.constant 0 : index
      %c0_30 = arith.constant 0 : index
      %60 = vector.load %arg7[%59, %c0_29, %c0_30] : memref<4x4x1xf32, #tpu.memory_space<vmem>>, vector<1x4x1xf32>
      %61 = vector.shape_cast %60 : vector<1x4x1xf32> to vector<4x1xf32>
      %62 = vector.broadcast %61 : vector<4x1xf32> to vector<4x256xf32>
      %63 = arith.addf %58, %62 : vector<4x256xf32>
      %cst_31 = arith.constant 0.000000e+00 : f32
      %64 = vector.broadcast %cst_31 : f32 to vector<4x256xf32>
      %65 = arith.maximumf %63, %64 : vector<4x256xf32>
      %66 = arith.index_cast %arg11 : i32 to index
      %c0_32 = arith.constant 0 : index
      %c0_33 = arith.constant 0 : index
      %67 = vector.load %arg4[%66, %c0_32, %c0_33] : memref<4x4x36xf32, #tpu.memory_space<vmem>>, vector<1x4x36xf32>
      %68 = vector.shape_cast %67 : vector<1x4x36xf32> to vector<4x36xf32>
      %c17_i32_34 = arith.constant 17 : i32
      %69 = tpu.dynamic_rotate %65 by %c17_i32_34 dim 1 : vector<4x256xf32>, i32 -> vector<4x256xf32>
      %70 = vector.extract_strided_slice %0 {offsets = [0, 0], sizes = [1, 256], strides = [1, 1]} : vector<9x256xf32> to vector<1x256xf32>
      %71 = vector.broadcast %70 : vector<1x256xf32> to vector<4x256xf32>
      %72 = arith.mulf %69, %71 : vector<4x256xf32>
      %c0_35 = arith.constant 0 : index
      %c0_36 = arith.constant 0 : index
      %73 = vector.load %arg10[%c0_35, %c0_36] : memref<36x256xf32, #tpu.memory_space<vmem>>, vector<4x256xf32>
      tpu.vector_store %arg10[%c0_35, %c0_36], %72 {strides = array<i32>} : memref<36x256xf32, #tpu.memory_space<vmem>>, vector<4x256xf32>,
      %c16_i32_37 = arith.constant 16 : i32
      %74 = tpu.dynamic_rotate %65 by %c16_i32_37 dim 1 : vector<4x256xf32>, i32 -> vector<4x256xf32>
      %75 = vector.extract_strided_slice %0 {offsets = [1, 0], sizes = [1, 256], strides = [1, 1]} : vector<9x256xf32> to vector<1x256xf32>
      %76 = vector.broadcast %75 : vector<1x256xf32> to vector<4x256xf32>
      %77 = arith.mulf %74, %76 : vector<4x256xf32>
      %c4_38 = arith.constant 4 : index
      %c0_39 = arith.constant 0 : index
      %78 = vector.load %arg10[%c4_38, %c0_39] : memref<36x256xf32, #tpu.memory_space<vmem>>, vector<4x256xf32>
      tpu.vector_store %arg10[%c4_38, %c0_39], %77 {strides = array<i32>} : memref<36x256xf32, #tpu.memory_space<vmem>>, vector<4x256xf32>,
      %c15_i32_40 = arith.constant 15 : i32
      %79 = tpu.dynamic_rotate %65 by %c15_i32_40 dim 1 : vector<4x256xf32>, i32 -> vector<4x256xf32>
      %80 = vector.extract_strided_slice %0 {offsets = [2, 0], sizes = [1, 256], strides = [1, 1]} : vector<9x256xf32> to vector<1x256xf32>
      %81 = vector.broadcast %80 : vector<1x256xf32> to vector<4x256xf32>
      %82 = arith.mulf %79, %81 : vector<4x256xf32>
      %c8_41 = arith.constant 8 : index
      %c0_42 = arith.constant 0 : index
      %83 = vector.load %arg10[%c8_41, %c0_42] : memref<36x256xf32, #tpu.memory_space<vmem>>, vector<4x256xf32>
      tpu.vector_store %arg10[%c8_41, %c0_42], %82 {strides = array<i32>} : memref<36x256xf32, #tpu.memory_space<vmem>>, vector<4x256xf32>,
      %c1_i32_43 = arith.constant 1 : i32
      %84 = tpu.dynamic_rotate %65 by %c1_i32_43 dim 1 : vector<4x256xf32>, i32 -> vector<4x256xf32>
      %85 = vector.extract_strided_slice %0 {offsets = [3, 0], sizes = [1, 256], strides = [1, 1]} : vector<9x256xf32> to vector<1x256xf32>
      %86 = vector.broadcast %85 : vector<1x256xf32> to vector<4x256xf32>
      %87 = arith.mulf %84, %86 : vector<4x256xf32>
      %c12_44 = arith.constant 12 : index
      %c0_45 = arith.constant 0 : index
      %88 = vector.load %arg10[%c12_44, %c0_45] : memref<36x256xf32, #tpu.memory_space<vmem>>, vector<4x256xf32>
      tpu.vector_store %arg10[%c12_44, %c0_45], %87 {strides = array<i32>} : memref<36x256xf32, #tpu.memory_space<vmem>>, vector<4x256xf32>,
      %c16_46 = arith.constant 16 : index
      %c0_47 = arith.constant 0 : index
      %89 = vector.load %arg10[%c16_46, %c0_47] : memref<36x256xf32, #tpu.memory_space<vmem>>, vector<4x256xf32>
      tpu.vector_store %arg10[%c16_46, %c0_47], %65 {strides = array<i32>} : memref<36x256xf32, #tpu.memory_space<vmem>>, vector<4x256xf32>,
      %c255_i32_48 = arith.constant 255 : i32
      %90 = tpu.dynamic_rotate %65 by %c255_i32_48 dim 1 : vector<4x256xf32>, i32 -> vector<4x256xf32>
      %91 = vector.extract_strided_slice %0 {offsets = [5, 0], sizes = [1, 256], strides = [1, 1]} : vector<9x256xf32> to vector<1x256xf32>
      %92 = vector.broadcast %91 : vector<1x256xf32> to vector<4x256xf32>
      %93 = arith.mulf %90, %92 : vector<4x256xf32>
      %c20_49 = arith.constant 20 : index
      %c0_50 = arith.constant 0 : index
      %94 = vector.load %arg10[%c20_49, %c0_50] : memref<36x256xf32, #tpu.memory_space<vmem>>, vector<4x256xf32>
      tpu.vector_store %arg10[%c20_49, %c0_50], %93 {strides = array<i32>} : memref<36x256xf32, #tpu.memory_space<vmem>>, vector<4x256xf32>,
      %c241_i32_51 = arith.constant 241 : i32
      %95 = tpu.dynamic_rotate %65 by %c241_i32_51 dim 1 : vector<4x256xf32>, i32 -> vector<4x256xf32>
      %96 = vector.extract_strided_slice %0 {offsets = [6, 0], sizes = [1, 256], strides = [1, 1]} : vector<9x256xf32> to vector<1x256xf32>
      %97 = vector.broadcast %96 : vector<1x256xf32> to vector<4x256xf32>
      %98 = arith.mulf %95, %97 : vector<4x256xf32>
      %c24_52 = arith.constant 24 : index
      %c0_53 = arith.constant 0 : index
      %99 = vector.load %arg10[%c24_52, %c0_53] : memref<36x256xf32, #tpu.memory_space<vmem>>, vector<4x256xf32>
      tpu.vector_store %arg10[%c24_52, %c0_53], %98 {strides = array<i32>} : memref<36x256xf32, #tpu.memory_space<vmem>>, vector<4x256xf32>,
      %c240_i32_54 = arith.constant 240 : i32
      %100 = tpu.dynamic_rotate %65 by %c240_i32_54 dim 1 : vector<4x256xf32>, i32 -> vector<4x256xf32>
      %101 = vector.extract_strided_slice %0 {offsets = [7, 0], sizes = [1, 256], strides = [1, 1]} : vector<9x256xf32> to vector<1x256xf32>
      %102 = vector.broadcast %101 : vector<1x256xf32> to vector<4x256xf32>
      %103 = arith.mulf %100, %102 : vector<4x256xf32>
      %c28_55 = arith.constant 28 : index
      %c0_56 = arith.constant 0 : index
      %104 = vector.load %arg10[%c28_55, %c0_56] : memref<36x256xf32, #tpu.memory_space<vmem>>, vector<4x256xf32>
      tpu.vector_store %arg10[%c28_55, %c0_56], %103 {strides = array<i32>} : memref<36x256xf32, #tpu.memory_space<vmem>>, vector<4x256xf32>,
      %c239_i32_57 = arith.constant 239 : i32
      %105 = tpu.dynamic_rotate %65 by %c239_i32_57 dim 1 : vector<4x256xf32>, i32 -> vector<4x256xf32>
      %106 = vector.extract_strided_slice %0 {offsets = [8, 0], sizes = [1, 256], strides = [1, 1]} : vector<9x256xf32> to vector<1x256xf32>
      %107 = vector.broadcast %106 : vector<1x256xf32> to vector<4x256xf32>
      %108 = arith.mulf %105, %107 : vector<4x256xf32>
      %c32_58 = arith.constant 32 : index
      %c0_59 = arith.constant 0 : index
      %109 = vector.load %arg10[%c32_58, %c0_59] : memref<36x256xf32, #tpu.memory_space<vmem>>, vector<4x256xf32>
      tpu.vector_store %arg10[%c32_58, %c0_59], %108 {strides = array<i32>} : memref<36x256xf32, #tpu.memory_space<vmem>>, vector<4x256xf32>,
      %c0_60 = arith.constant 0 : index
      %c0_61 = arith.constant 0 : index
      %110 = vector.load %arg10[%c0_60, %c0_61] : memref<36x256xf32, #tpu.memory_space<vmem>>, vector<36x256xf32>
      %cst_62 = arith.constant dense<0.000000e+00> : vector<4x256xf32>
      %111 = tpu.matmul %68, %110, %cst_62 {dimension_numbers = #tpu.dot_dimension_numbers<[1], [0], [0], [1], [0, 0, 1, 1], [], []>} : vector<4x36xf32>, vector<36x256xf32>, vector<4x256xf32> -> vector<4x256xf32>
      %cst_63 = arith.constant 1.000000e-01 : f32
      %112 = vector.broadcast %cst_63 : f32 to vector<4x256xf32>
      %113 = arith.mulf %112, %111 : vector<4x256xf32>
      %114 = arith.addf %arg12, %113 : vector<4x256xf32>
      %115 = arith.index_cast %arg11 : i32 to index
      %c0_64 = arith.constant 0 : index
      %c0_65 = arith.constant 0 : index
      %116 = vector.load %arg5[%115, %c0_64, %c0_65] : memref<4x4x36xf32, #tpu.memory_space<vmem>>, vector<1x4x36xf32>
      %117 = vector.shape_cast %116 : vector<1x4x36xf32> to vector<4x36xf32>
      %c17_i32_66 = arith.constant 17 : i32
      %118 = tpu.dynamic_rotate %114 by %c17_i32_66 dim 1 : vector<4x256xf32>, i32 -> vector<4x256xf32>
      %119 = vector.extract_strided_slice %0 {offsets = [0, 0], sizes = [1, 256], strides = [1, 1]} : vector<9x256xf32> to vector<1x256xf32>
      %120 = vector.broadcast %119 : vector<1x256xf32> to vector<4x256xf32>
      %121 = arith.mulf %118, %120 : vector<4x256xf32>
      %c0_67 = arith.constant 0 : index
      %c0_68 = arith.constant 0 : index
      %122 = vector.load %arg10[%c0_67, %c0_68] : memref<36x256xf32, #tpu.memory_space<vmem>>, vector<4x256xf32>
      tpu.vector_store %arg10[%c0_67, %c0_68], %121 {strides = array<i32>} : memref<36x256xf32, #tpu.memory_space<vmem>>, vector<4x256xf32>,
      %c16_i32_69 = arith.constant 16 : i32
      %123 = tpu.dynamic_rotate %114 by %c16_i32_69 dim 1 : vector<4x256xf32>, i32 -> vector<4x256xf32>
      %124 = vector.extract_strided_slice %0 {offsets = [1, 0], sizes = [1, 256], strides = [1, 1]} : vector<9x256xf32> to vector<1x256xf32>
      %125 = vector.broadcast %124 : vector<1x256xf32> to vector<4x256xf32>
      %126 = arith.mulf %123, %125 : vector<4x256xf32>
      %c4_70 = arith.constant 4 : index
      %c0_71 = arith.constant 0 : index
      %127 = vector.load %arg10[%c4_70, %c0_71] : memref<36x256xf32, #tpu.memory_space<vmem>>, vector<4x256xf32>
      tpu.vector_store %arg10[%c4_70, %c0_71], %126 {strides = array<i32>} : memref<36x256xf32, #tpu.memory_space<vmem>>, vector<4x256xf32>,
      %c15_i32_72 = arith.constant 15 : i32
      %128 = tpu.dynamic_rotate %114 by %c15_i32_72 dim 1 : vector<4x256xf32>, i32 -> vector<4x256xf32>
      %129 = vector.extract_strided_slice %0 {offsets = [2, 0], sizes = [1, 256], strides = [1, 1]} : vector<9x256xf32> to vector<1x256xf32>
      %130 = vector.broadcast %129 : vector<1x256xf32> to vector<4x256xf32>
      %131 = arith.mulf %128, %130 : vector<4x256xf32>
      %c8_73 = arith.constant 8 : index
      %c0_74 = arith.constant 0 : index
      %132 = vector.load %arg10[%c8_73, %c0_74] : memref<36x256xf32, #tpu.memory_space<vmem>>, vector<4x256xf32>
      tpu.vector_store %arg10[%c8_73, %c0_74], %131 {strides = array<i32>} : memref<36x256xf32, #tpu.memory_space<vmem>>, vector<4x256xf32>,
      %c1_i32_75 = arith.constant 1 : i32
      %133 = tpu.dynamic_rotate %114 by %c1_i32_75 dim 1 : vector<4x256xf32>, i32 -> vector<4x256xf32>
      %134 = vector.extract_strided_slice %0 {offsets = [3, 0], sizes = [1, 256], strides = [1, 1]} : vector<9x256xf32> to vector<1x256xf32>
      %135 = vector.broadcast %134 : vector<1x256xf32> to vector<4x256xf32>
      %136 = arith.mulf %133, %135 : vector<4x256xf32>
      %c12_76 = arith.constant 12 : index
      %c0_77 = arith.constant 0 : index
      %137 = vector.load %arg10[%c12_76, %c0_77] : memref<36x256xf32, #tpu.memory_space<vmem>>, vector<4x256xf32>
      tpu.vector_store %arg10[%c12_76, %c0_77], %136 {strides = array<i32>} : memref<36x256xf32, #tpu.memory_space<vmem>>, vector<4x256xf32>,
      %c16_78 = arith.constant 16 : index
      %c0_79 = arith.constant 0 : index
      %138 = vector.load %arg10[%c16_78, %c0_79] : memref<36x256xf32, #tpu.memory_space<vmem>>, vector<4x256xf32>
      tpu.vector_store %arg10[%c16_78, %c0_79], %114 {strides = array<i32>} : memref<36x256xf32, #tpu.memory_space<vmem>>, vector<4x256xf32>,
      %c255_i32_80 = arith.constant 255 : i32
      %139 = tpu.dynamic_rotate %114 by %c255_i32_80 dim 1 : vector<4x256xf32>, i32 -> vector<4x256xf32>
      %140 = vector.extract_strided_slice %0 {offsets = [5, 0], sizes = [1, 256], strides = [1, 1]} : vector<9x256xf32> to vector<1x256xf32>
      %141 = vector.broadcast %140 : vector<1x256xf32> to vector<4x256xf32>
      %142 = arith.mulf %139, %141 : vector<4x256xf32>
      %c20_81 = arith.constant 20 : index
      %c0_82 = arith.constant 0 : index
      %143 = vector.load %arg10[%c20_81, %c0_82] : memref<36x256xf32, #tpu.memory_space<vmem>>, vector<4x256xf32>
      tpu.vector_store %arg10[%c20_81, %c0_82], %142 {strides = array<i32>} : memref<36x256xf32, #tpu.memory_space<vmem>>, vector<4x256xf32>,
      %c241_i32_83 = arith.constant 241 : i32
      %144 = tpu.dynamic_rotate %114 by %c241_i32_83 dim 1 : vector<4x256xf32>, i32 -> vector<4x256xf32>
      %145 = vector.extract_strided_slice %0 {offsets = [6, 0], sizes = [1, 256], strides = [1, 1]} : vector<9x256xf32> to vector<1x256xf32>
      %146 = vector.broadcast %145 : vector<1x256xf32> to vector<4x256xf32>
      %147 = arith.mulf %144, %146 : vector<4x256xf32>
      %c24_84 = arith.constant 24 : index
      %c0_85 = arith.constant 0 : index
      %148 = vector.load %arg10[%c24_84, %c0_85] : memref<36x256xf32, #tpu.memory_space<vmem>>, vector<4x256xf32>
      tpu.vector_store %arg10[%c24_84, %c0_85], %147 {strides = array<i32>} : memref<36x256xf32, #tpu.memory_space<vmem>>, vector<4x256xf32>,
      %c240_i32_86 = arith.constant 240 : i32
      %149 = tpu.dynamic_rotate %114 by %c240_i32_86 dim 1 : vector<4x256xf32>, i32 -> vector<4x256xf32>
      %150 = vector.extract_strided_slice %0 {offsets = [7, 0], sizes = [1, 256], strides = [1, 1]} : vector<9x256xf32> to vector<1x256xf32>
      %151 = vector.broadcast %150 : vector<1x256xf32> to vector<4x256xf32>
      %152 = arith.mulf %149, %151 : vector<4x256xf32>
      %c28_87 = arith.constant 28 : index
      %c0_88 = arith.constant 0 : index
      %153 = vector.load %arg10[%c28_87, %c0_88] : memref<36x256xf32, #tpu.memory_space<vmem>>, vector<4x256xf32>
      tpu.vector_store %arg10[%c28_87, %c0_88], %152 {strides = array<i32>} : memref<36x256xf32, #tpu.memory_space<vmem>>, vector<4x256xf32>,
      %c239_i32_89 = arith.constant 239 : i32
      %154 = tpu.dynamic_rotate %114 by %c239_i32_89 dim 1 : vector<4x256xf32>, i32 -> vector<4x256xf32>
      %155 = vector.extract_strided_slice %0 {offsets = [8, 0], sizes = [1, 256], strides = [1, 1]} : vector<9x256xf32> to vector<1x256xf32>
      %156 = vector.broadcast %155 : vector<1x256xf32> to vector<4x256xf32>
      %157 = arith.mulf %154, %156 : vector<4x256xf32>
      %c32_90 = arith.constant 32 : index
      %c0_91 = arith.constant 0 : index
      %158 = vector.load %arg10[%c32_90, %c0_91] : memref<36x256xf32, #tpu.memory_space<vmem>>, vector<4x256xf32>
      tpu.vector_store %arg10[%c32_90, %c0_91], %157 {strides = array<i32>} : memref<36x256xf32, #tpu.memory_space<vmem>>, vector<4x256xf32>,
      %c0_92 = arith.constant 0 : index
      %c0_93 = arith.constant 0 : index
      %159 = vector.load %arg10[%c0_92, %c0_93] : memref<36x256xf32, #tpu.memory_space<vmem>>, vector<36x256xf32>
      %cst_94 = arith.constant dense<0.000000e+00> : vector<4x256xf32>
      %160 = tpu.matmul %117, %159, %cst_94 {dimension_numbers = #tpu.dot_dimension_numbers<[1], [0], [0], [1], [0, 0, 1, 1], [], []>} : vector<4x36xf32>, vector<36x256xf32>, vector<4x256xf32> -> vector<4x256xf32>
      %161 = arith.index_cast %arg11 : i32 to index
      %c0_95 = arith.constant 0 : index
      %c0_96 = arith.constant 0 : index
      %162 = vector.load %arg8[%161, %c0_95, %c0_96] : memref<4x4x1xf32, #tpu.memory_space<vmem>>, vector<1x4x1xf32>
      %163 = vector.shape_cast %162 : vector<1x4x1xf32> to vector<4x1xf32>
      %164 = vector.broadcast %163 : vector<4x1xf32> to vector<4x256xf32>
      %165 = arith.addf %160, %164 : vector<4x256xf32>
      %cst_97 = arith.constant 0.000000e+00 : f32
      %166 = vector.broadcast %cst_97 : f32 to vector<4x256xf32>
      %167 = arith.maximumf %165, %166 : vector<4x256xf32>
      %168 = arith.index_cast %arg11 : i32 to index
      %c0_98 = arith.constant 0 : index
      %c0_99 = arith.constant 0 : index
      %169 = vector.load %arg6[%168, %c0_98, %c0_99] : memref<4x4x36xf32, #tpu.memory_space<vmem>>, vector<1x4x36xf32>
      %170 = vector.shape_cast %169 : vector<1x4x36xf32> to vector<4x36xf32>
      %c17_i32_100 = arith.constant 17 : i32
      %171 = tpu.dynamic_rotate %167 by %c17_i32_100 dim 1 : vector<4x256xf32>, i32 -> vector<4x256xf32>
      %172 = vector.extract_strided_slice %0 {offsets = [0, 0], sizes = [1, 256], strides = [1, 1]} : vector<9x256xf32> to vector<1x256xf32>
      %173 = vector.broadcast %172 : vector<1x256xf32> to vector<4x256xf32>
      %174 = arith.mulf %171, %173 : vector<4x256xf32>
      %c0_101 = arith.constant 0 : index
      %c0_102 = arith.constant 0 : index
      %175 = vector.load %arg10[%c0_101, %c0_102] : memref<36x256xf32, #tpu.memory_space<vmem>>, vector<4x256xf32>
      tpu.vector_store %arg10[%c0_101, %c0_102], %174 {strides = array<i32>} : memref<36x256xf32, #tpu.memory_space<vmem>>, vector<4x256xf32>,
      %c16_i32_103 = arith.constant 16 : i32
      %176 = tpu.dynamic_rotate %167 by %c16_i32_103 dim 1 : vector<4x256xf32>, i32 -> vector<4x256xf32>
      %177 = vector.extract_strided_slice %0 {offsets = [1, 0], sizes = [1, 256], strides = [1, 1]} : vector<9x256xf32> to vector<1x256xf32>
      %178 = vector.broadcast %177 : vector<1x256xf32> to vector<4x256xf32>
      %179 = arith.mulf %176, %178 : vector<4x256xf32>
      %c4_104 = arith.constant 4 : index
      %c0_105 = arith.constant 0 : index
      %180 = vector.load %arg10[%c4_104, %c0_105] : memref<36x256xf32, #tpu.memory_space<vmem>>, vector<4x256xf32>
      tpu.vector_store %arg10[%c4_104, %c0_105], %179 {strides = array<i32>} : memref<36x256xf32, #tpu.memory_space<vmem>>, vector<4x256xf32>,
      %c15_i32_106 = arith.constant 15 : i32
      %181 = tpu.dynamic_rotate %167 by %c15_i32_106 dim 1 : vector<4x256xf32>, i32 -> vector<4x256xf32>
      %182 = vector.extract_strided_slice %0 {offsets = [2, 0], sizes = [1, 256], strides = [1, 1]} : vector<9x256xf32> to vector<1x256xf32>
      %183 = vector.broadcast %182 : vector<1x256xf32> to vector<4x256xf32>
      %184 = arith.mulf %181, %183 : vector<4x256xf32>
      %c8_107 = arith.constant 8 : index
      %c0_108 = arith.constant 0 : index
      %185 = vector.load %arg10[%c8_107, %c0_108] : memref<36x256xf32, #tpu.memory_space<vmem>>, vector<4x256xf32>
      tpu.vector_store %arg10[%c8_107, %c0_108], %184 {strides = array<i32>} : memref<36x256xf32, #tpu.memory_space<vmem>>, vector<4x256xf32>,
      %c1_i32_109 = arith.constant 1 : i32
      %186 = tpu.dynamic_rotate %167 by %c1_i32_109 dim 1 : vector<4x256xf32>, i32 -> vector<4x256xf32>
      %187 = vector.extract_strided_slice %0 {offsets = [3, 0], sizes = [1, 256], strides = [1, 1]} : vector<9x256xf32> to vector<1x256xf32>
      %188 = vector.broadcast %187 : vector<1x256xf32> to vector<4x256xf32>
      %189 = arith.mulf %186, %188 : vector<4x256xf32>
      %c12_110 = arith.constant 12 : index
      %c0_111 = arith.constant 0 : index
      %190 = vector.load %arg10[%c12_110, %c0_111] : memref<36x256xf32, #tpu.memory_space<vmem>>, vector<4x256xf32>
      tpu.vector_store %arg10[%c12_110, %c0_111], %189 {strides = array<i32>} : memref<36x256xf32, #tpu.memory_space<vmem>>, vector<4x256xf32>,
      %c16_112 = arith.constant 16 : index
      %c0_113 = arith.constant 0 : index
      %191 = vector.load %arg10[%c16_112, %c0_113] : memref<36x256xf32, #tpu.memory_space<vmem>>, vector<4x256xf32>
      tpu.vector_store %arg10[%c16_112, %c0_113], %167 {strides = array<i32>} : memref<36x256xf32, #tpu.memory_space<vmem>>, vector<4x256xf32>,
      %c255_i32_114 = arith.constant 255 : i32
      %192 = tpu.dynamic_rotate %167 by %c255_i32_114 dim 1 : vector<4x256xf32>, i32 -> vector<4x256xf32>
      %193 = vector.extract_strided_slice %0 {offsets = [5, 0], sizes = [1, 256], strides = [1, 1]} : vector<9x256xf32> to vector<1x256xf32>
      %194 = vector.broadcast %193 : vector<1x256xf32> to vector<4x256xf32>
      %195 = arith.mulf %192, %194 : vector<4x256xf32>
      %c20_115 = arith.constant 20 : index
      %c0_116 = arith.constant 0 : index
      %196 = vector.load %arg10[%c20_115, %c0_116] : memref<36x256xf32, #tpu.memory_space<vmem>>, vector<4x256xf32>
      tpu.vector_store %arg10[%c20_115, %c0_116], %195 {strides = array<i32>} : memref<36x256xf32, #tpu.memory_space<vmem>>, vector<4x256xf32>,
      %c241_i32_117 = arith.constant 241 : i32
      %197 = tpu.dynamic_rotate %167 by %c241_i32_117 dim 1 : vector<4x256xf32>, i32 -> vector<4x256xf32>
      %198 = vector.extract_strided_slice %0 {offsets = [6, 0], sizes = [1, 256], strides = [1, 1]} : vector<9x256xf32> to vector<1x256xf32>
      %199 = vector.broadcast %198 : vector<1x256xf32> to vector<4x256xf32>
      %200 = arith.mulf %197, %199 : vector<4x256xf32>
      %c24_118 = arith.constant 24 : index
      %c0_119 = arith.constant 0 : index
      %201 = vector.load %arg10[%c24_118, %c0_119] : memref<36x256xf32, #tpu.memory_space<vmem>>, vector<4x256xf32>
      tpu.vector_store %arg10[%c24_118, %c0_119], %200 {strides = array<i32>} : memref<36x256xf32, #tpu.memory_space<vmem>>, vector<4x256xf32>,
      %c240_i32_120 = arith.constant 240 : i32
      %202 = tpu.dynamic_rotate %167 by %c240_i32_120 dim 1 : vector<4x256xf32>, i32 -> vector<4x256xf32>
      %203 = vector.extract_strided_slice %0 {offsets = [7, 0], sizes = [1, 256], strides = [1, 1]} : vector<9x256xf32> to vector<1x256xf32>
      %204 = vector.broadcast %203 : vector<1x256xf32> to vector<4x256xf32>
      %205 = arith.mulf %202, %204 : vector<4x256xf32>
      %c28_121 = arith.constant 28 : index
      %c0_122 = arith.constant 0 : index
      %206 = vector.load %arg10[%c28_121, %c0_122] : memref<36x256xf32, #tpu.memory_space<vmem>>, vector<4x256xf32>
      tpu.vector_store %arg10[%c28_121, %c0_122], %205 {strides = array<i32>} : memref<36x256xf32, #tpu.memory_space<vmem>>, vector<4x256xf32>,
      %c239_i32_123 = arith.constant 239 : i32
      %207 = tpu.dynamic_rotate %167 by %c239_i32_123 dim 1 : vector<4x256xf32>, i32 -> vector<4x256xf32>
      %208 = vector.extract_strided_slice %0 {offsets = [8, 0], sizes = [1, 256], strides = [1, 1]} : vector<9x256xf32> to vector<1x256xf32>
      %209 = vector.broadcast %208 : vector<1x256xf32> to vector<4x256xf32>
      %210 = arith.mulf %207, %209 : vector<4x256xf32>
      %c32_124 = arith.constant 32 : index
      %c0_125 = arith.constant 0 : index
      %211 = vector.load %arg10[%c32_124, %c0_125] : memref<36x256xf32, #tpu.memory_space<vmem>>, vector<4x256xf32>
      tpu.vector_store %arg10[%c32_124, %c0_125], %210 {strides = array<i32>} : memref<36x256xf32, #tpu.memory_space<vmem>>, vector<4x256xf32>,
      %c0_126 = arith.constant 0 : index
      %c0_127 = arith.constant 0 : index
      %212 = vector.load %arg10[%c0_126, %c0_127] : memref<36x256xf32, #tpu.memory_space<vmem>>, vector<36x256xf32>
      %cst_128 = arith.constant dense<0.000000e+00> : vector<4x256xf32>
      %213 = tpu.matmul %170, %212, %cst_128 {dimension_numbers = #tpu.dot_dimension_numbers<[1], [0], [0], [1], [0, 0, 1, 1], [], []>} : vector<4x36xf32>, vector<36x256xf32>, vector<4x256xf32> -> vector<4x256xf32>
      %cst_129 = arith.constant 1.000000e-01 : f32
      %214 = vector.broadcast %cst_129 : f32 to vector<4x256xf32>
      %215 = arith.mulf %214, %213 : vector<4x256xf32>
      %216 = arith.subf %arg13, %215 : vector<4x256xf32>
      scf.yield %114, %216 : vector<4x256xf32>, vector<4x256xf32>
    }
    %c4_i32_6 = arith.constant 4 : i32
    %c0_7 = arith.constant 0 : index
    %c0_8 = arith.constant 0 : index
    %c0_9 = arith.constant 0 : index
    %7 = vector.load %arg9[%c0_7, %c0_8, %c0_9] : memref<1x8x256xf32, #tpu.memory_space<vmem>>, vector<1x4x256xf32>
    %8 = vector.shape_cast %7 : vector<1x4x256xf32> to vector<4x256xf32>
    %9 = vector.shape_cast %6#0 : vector<4x256xf32> to vector<1x4x256xf32>
    tpu.vector_store %arg9[%c0_7, %c0_8, %c0_9], %9 {strides = array<i32>} : memref<1x8x256xf32, #tpu.memory_space<vmem>>, vector<1x4x256xf32>,
    %c0_10 = arith.constant 0 : index
    %c4_11 = arith.constant 4 : index
    %c0_12 = arith.constant 0 : index
    %10 = vector.load %arg9[%c0_10, %c4_11, %c0_12] : memref<1x8x256xf32, #tpu.memory_space<vmem>>, vector<1x4x256xf32>
    %11 = vector.shape_cast %10 : vector<1x4x256xf32> to vector<4x256xf32>
    %12 = vector.shape_cast %6#1 : vector<4x256xf32> to vector<1x4x256xf32>
    tpu.vector_store %arg9[%c0_10, %c4_11, %c0_12], %12 {strides = array<i32>} : memref<1x8x256xf32, #tpu.memory_space<vmem>>, vector<1x4x256xf32>,
    return
  }
  func.func @transform_0(%arg0: i32) -> (i32, i32, i32) {
    %c0_i32 = arith.constant 0 : i32
    %c0_i32_0 = arith.constant 0 : i32
    %c0_i32_1 = arith.constant 0 : i32
    return %arg0, %c0_i32, %c0_i32_0 : i32, i32, i32
  }
  func.func @transform_1(%arg0: i32) -> (i32, i32) {
    %c0_i32 = arith.constant 0 : i32
    %c0_i32_0 = arith.constant 0 : i32
    %c0_i32_1 = arith.constant 0 : i32
    return %c0_i32, %c0_i32_0 : i32, i32
  }
  func.func @transform_2(%arg0: i32) -> (i32, i32, i32) {
    %c0_i32 = arith.constant 0 : i32
    %c0_i32_0 = arith.constant 0 : i32
    %c0_i32_1 = arith.constant 0 : i32
    %c0_i32_2 = arith.constant 0 : i32
    return %c0_i32, %c0_i32_0, %c0_i32_1 : i32, i32, i32
  }
  func.func @transform_3(%arg0: i32) -> (i32, i32, i32) {
    %c0_i32 = arith.constant 0 : i32
    %c0_i32_0 = arith.constant 0 : i32
    %c0_i32_1 = arith.constant 0 : i32
    %c0_i32_2 = arith.constant 0 : i32
    return %c0_i32, %c0_i32_0, %c0_i32_1 : i32, i32, i32
  }
  func.func @transform_4(%arg0: i32) -> (i32, i32, i32) {
    %c0_i32 = arith.constant 0 : i32
    %c0_i32_0 = arith.constant 0 : i32
    %c0_i32_1 = arith.constant 0 : i32
    %c0_i32_2 = arith.constant 0 : i32
    return %c0_i32, %c0_i32_0, %c0_i32_1 : i32, i32, i32
  }
  func.func @transform_5(%arg0: i32) -> (i32, i32, i32) {
    %c0_i32 = arith.constant 0 : i32
    %c0_i32_0 = arith.constant 0 : i32
    %c0_i32_1 = arith.constant 0 : i32
    %c0_i32_2 = arith.constant 0 : i32
    return %c0_i32, %c0_i32_0, %c0_i32_1 : i32, i32, i32
  }
  func.func @transform_6(%arg0: i32) -> (i32, i32, i32) {
    %c0_i32 = arith.constant 0 : i32
    %c0_i32_0 = arith.constant 0 : i32
    %c0_i32_1 = arith.constant 0 : i32
    %c0_i32_2 = arith.constant 0 : i32
    return %c0_i32, %c0_i32_0, %c0_i32_1 : i32, i32, i32
  }
  func.func @transform_7(%arg0: i32) -> (i32, i32, i32) {
    %c0_i32 = arith.constant 0 : i32
    %c0_i32_0 = arith.constant 0 : i32
    %c0_i32_1 = arith.constant 0 : i32
    %c0_i32_2 = arith.constant 0 : i32
    return %c0_i32, %c0_i32_0, %c0_i32_1 : i32, i32, i32
  }
  func.func @transform_8(%arg0: i32) -> (i32, i32, i32) {
    %c0_i32 = arith.constant 0 : i32
    %c0_i32_0 = arith.constant 0 : i32
    %c0_i32_1 = arith.constant 0 : i32
    return %arg0, %c0_i32, %c0_i32_0 : i32, i32, i32
  }
}

</mosaic_0001>

<llo_original>
// kernel: tpu_custom_call.1
$region0: #{tpu_custom_call.1}
  #allocation0 [shape = 'u32[]', space=smem, size = 0x4, offset = 0x4, fixed_abs, tag = 'smem constant byte address 0x4 - core index']
  #allocation1 [shape = 'u32[144,128]{1,0:T(1,128)}', space=vmem, size = 0x12000, scoped, tag = 'internal scratch']
  #allocation2 [shape = 'f32[36,256]{1,0:T(8,128)}', space=vmem, size = 0xa000, scoped, tag = 'scratch operand']
  %s0 = inlined_call_operand.vmem [shape: f32[2,8,256], index: 0, kind: input, shape index: {}]
  %s1 = inlined_call_operand.hbm [shape: f32[9,256], index: 1, kind: input, shape index: {}]
  %s2 = inlined_call_operand.hbm [shape: f32[4,4,36], index: 2, kind: input, shape index: {}]
  %s3 = inlined_call_operand.vmem [shape: f32[4,4,36], index: 3, kind: input, shape index: {}]
  %s4 = inlined_call_operand.hbm [shape: f32[4,4,36], index: 4, kind: input, shape index: {}]
  %s5 = inlined_call_operand.hbm [shape: f32[4,4,36], index: 5, kind: input, shape index: {}]
  %s6 = inlined_call_operand.vmem [shape: f32[4,4,1], index: 6, kind: input, shape index: {}]
  %s7 = inlined_call_operand.vmem [shape: f32[4,4,1], index: 7, kind: input, shape index: {}]
  %s8 = inlined_call_operand.hbm [shape: f32[2,8,256], index: 8, kind: output, shape index: {}]
  %s9 = sld [smem:[#allocation0]]
  $region88: #{tpu_custom_call.1} parent=0
    _
  %s11 = ssub.s32 1, %s9
  %s12 = scalar_select 0, %s11, %s9
  $region1: #{tpu_custom_call.1} parent=0
    #allocation3 [shape = 'u8[16384]{0}', space=vmem, size = 0x4000, scoped, tag = 'input window, operand 1, single buffered']
    #allocation4 [shape = 's32[2]{0}', space=sflag, size = 0x8, scoped, tag = 'scoped memory for tpu_custom_call.1']
    #allocation5 [shape = 's32[2]{0}', space=sflag, size = 0x8, scoped, tag = 'scoped memory for tpu_custom_call.1']
    #allocation6 [shape = 'u8[8192]{0}', space=vmem, size = 0x2000, scoped, tag = 'input window, operand 2, single buffered']
    #allocation7 [shape = 's32[1]{0}', space=sflag, size = 0x4, scoped, tag = 'scoped memory for tpu_custom_call.1']
    #allocation8 [shape = 'u8[8192]{0}', space=vmem, size = 0x2000, scoped, tag = 'input window, operand 4, single buffered']
    #allocation9 [shape = 'u8[8192]{0}', space=vmem, size = 0x2000, scoped, tag = 'input window, operand 5, single buffered']
    #allocation10 [shape = 's32[1]{0}', space=sflag, size = 0x4, scoped, tag = 'scoped memory for tpu_custom_call.1']
    #allocation11 [shape = 'u8[16384]{0}', space=vmem, size = 0x4000, scoped, tag = 'output window, operand 0']
    %13 = vsyncpa [#allocation4], 0
    %14 = vsyncpa [#allocation7], 0
    %15 = vsyncpa [#allocation10], 0
    %16 = vsyncpa [#allocation5], 0
    %s17 = scalar_lea.sflag [#allocation5], 1
    %18 = vsyncpa %s17, 0
    loop: start=0, step=1, limit=4
    $region2: #{tpu_custom_call.1} parent=1 // loop_pre_header
      _
    $region3: #{tpu_custom_call.1} parent=1 // loop_header
      %s20 = sphi 0, %s24
      %p21 = scmp.ge.s32.totalorder %s20, 4
      %s30 = sphi 0, %s32
      %s33 = sphi 0, %s30
      %s34 = sphi 0, %s33
      %s50 = sphi 0, %s34
      %s54 = sphi 0, %s54
      %s56 = sphi 0, %s54
      %s57 = sphi 0, %s56
      %s71 = sphi 0, %s57
      %s75 = sphi 0, %s75
      %s77 = sphi 0, %s75
      %s78 = sphi 0, %s77
      %s92 = sphi 0, %s78
      %s96 = sphi 0, %s96
      %s98 = sphi 0, %s96
      %s99 = sphi 0, %s98
      %s113 = sphi 0, %s99
      %s117 = sphi 0, %s117
      %s119 = sphi 0, %s117
      %s120 = sphi 0, %s119
      %s134 = sphi 0, %s120
      %s138 = sphi 0, %s138
      %s140 = sphi 0, %s138
      %s141 = sphi 0, %s140
      %s155 = sphi 0, %s141
      %s159 = sphi 0, %s159
      %s161 = sphi 0, %s159
      %s162 = sphi 0, %s161
      %s176 = sphi 0, %s162
      %s180 = sphi 0, %s180
      %s182 = sphi 0, %s180
      %s183 = sphi 0, %s182
      %s197 = sphi 0, %s183
      %s203 = sphi 0, %s205
      %s206 = sphi 0, %s203
      %s207 = sphi 0, %s206
      %s223 = sphi 0, %s207
    $region4: #{tpu_custom_call.1} parent=1 // loop_header_branch
      %23 = sbr.rel (%p21) target = $region8
    $region5: #{tpu_custom_call.1} parent=1 // loop_body
      %s25 = ssub.s32 %s20, 1
      %s26 = ssub.s32 %s20, 2
      %s27 = sadd.s32 %s20, 1
      %s28 = ssub.s32 %s20, %s27
      %p29 = scmp.eq.s32.totalorder %s28, 0
      %s31 = sadd.s32 %s30, 1
      %s32 = scalar_select %p29, %s30, %s31
      %p35 = pneg %p29
      %p36 = scmp.eq.s32.totalorder %s20, 1
      %p37 = por %p35, %p36
      %p38 = scmp.ne.s32.totalorder %s30, %s33
      %p39 = scmp.eq.s32.totalorder %s20, 0
      %p40 = por %p38, %p39
      %p41 = scmp.ne.s32.totalorder %s30, %s33
      %p42 = scmp.eq.s32.totalorder %s25, 1
      %p43 = por %p41, %p42
      %p44 = scmp.ne.s32.totalorder %s33, %s34
      %p45 = scmp.eq.s32.totalorder %s25, 0
      %p46 = por %p44, %p45
      %p47 = scmp.ne.s32.totalorder %s33, %s34
      %p48 = scmp.eq.s32.totalorder %s26, 1
      %p49 = por %p47, %p48
      %p51 = scmp.ne.s32.totalorder %s34, %s50
      %p52 = scmp.eq.s32.totalorder %s26, 0
      %p53 = por %p51, %p52
      %s55 = sadd.s32 %s54, 1
      %p58 = scmp.eq.s32.totalorder %s20, 1
      %p59 = scmp.ne.s32.totalorder %s54, %s56
      %p60 = scmp.eq.s32.totalorder %s20, 0
      %p61 = por %p59, %p60
      %p62 = scmp.ne.s32.totalorder %s54, %s56
      %p63 = scmp.eq.s32.totalorder %s25, 1
      %p64 = por %p62, %p63
      %p65 = scmp.ne.s32.totalorder %s56, %s57
      %p66 = scmp.eq.s32.totalorder %s25, 0
      %p67 = por %p65, %p66
      %p68 = scmp.ne.s32.totalorder %s56, %s57
      %p69 = scmp.eq.s32.totalorder %s26, 1
      %p70 = por %p68, %p69
      %p72 = scmp.ne.s32.totalorder %s57, %s71
      %p73 = scmp.eq.s32.totalorder %s26, 0
      %p74 = por %p72, %p73
      %s76 = sadd.s32 %s75, 1
      %p79 = scmp.eq.s32.totalorder %s20, 1
      %p80 = scmp.ne.s32.totalorder %s75, %s77
      %p81 = scmp.eq.s32.totalorder %s20, 0
      %p82 = por %p80, %p81
      %p83 = scmp.ne.s32.totalorder %s75, %s77
      %p84 = scmp.eq.s32.totalorder %s25, 1
      %p85 = por %p83, %p84
      %p86 = scmp.ne.s32.totalorder %s77, %s78
      %p87 = scmp.eq.s32.totalorder %s25, 0
      %p88 = por %p86, %p87
      %p89 = scmp.ne.s32.totalorder %s77, %s78
      %p90 = scmp.eq.s32.totalorder %s26, 1
      %p91 = por %p89, %p90
      %p93 = scmp.ne.s32.totalorder %s78, %s92
      %p94 = scmp.eq.s32.totalorder %s26, 0
      %p95 = por %p93, %p94
      %s97 = sadd.s32 %s96, 1
      %p100 = scmp.eq.s32.totalorder %s20, 1
      %p101 = scmp.ne.s32.totalorder %s96, %s98
      %p102 = scmp.eq.s32.totalorder %s20, 0
      %p103 = por %p101, %p102
      %p104 = scmp.ne.s32.totalorder %s96, %s98
      %p105 = scmp.eq.s32.totalorder %s25, 1
      %p106 = por %p104, %p105
      %p107 = scmp.ne.s32.totalorder %s98, %s99
      %p108 = scmp.eq.s32.totalorder %s25, 0
      %p109 = por %p107, %p108
      %p110 = scmp.ne.s32.totalorder %s98, %s99
      %p111 = scmp.eq.s32.totalorder %s26, 1
      %p112 = por %p110, %p111
      %p114 = scmp.ne.s32.totalorder %s99, %s113
      %p115 = scmp.eq.s32.totalorder %s26, 0
      %p116 = por %p114, %p115
      %s118 = sadd.s32 %s117, 1
      %p121 = scmp.eq.s32.totalorder %s20, 1
      %p122 = scmp.ne.s32.totalorder %s117, %s119
      %p123 = scmp.eq.s32.totalorder %s20, 0
      %p124 = por %p122, %p123
      %p125 = scmp.ne.s32.totalorder %s117, %s119
      %p126 = scmp.eq.s32.totalorder %s25, 1
      %p127 = por %p125, %p126
      %p128 = scmp.ne.s32.totalorder %s119, %s120
      %p129 = scmp.eq.s32.totalorder %s25, 0
      %p130 = por %p128, %p129
      %p131 = scmp.ne.s32.totalorder %s119, %s120
      %p132 = scmp.eq.s32.totalorder %s26, 1
      %p133 = por %p131, %p132
      %p135 = scmp.ne.s32.totalorder %s120, %s134
      %p136 = scmp.eq.s32.totalorder %s26, 0
      %p137 = por %p135, %p136
      %s139 = sadd.s32 %s138, 1
      %p142 = scmp.eq.s32.totalorder %s20, 1
      %p143 = scmp.ne.s32.totalorder %s138, %s140
      %p144 = scmp.eq.s32.totalorder %s20, 0
      %p145 = por %p143, %p144
      %p146 = scmp.ne.s32.totalorder %s138, %s140
      %p147 = scmp.eq.s32.totalorder %s25, 1
      %p148 = por %p146, %p147
      %p149 = scmp.ne.s32.totalorder %s140, %s141
      %p150 = scmp.eq.s32.totalorder %s25, 0
      %p151 = por %p149, %p150
      %p152 = scmp.ne.s32.totalorder %s140, %s141
      %p153 = scmp.eq.s32.totalorder %s26, 1
      %p154 = por %p152, %p153
      %p156 = scmp.ne.s32.totalorder %s141, %s155
      %p157 = scmp.eq.s32.totalorder %s26, 0
      %p158 = por %p156, %p157
      %s160 = sadd.s32 %s159, 1
      %p163 = scmp.eq.s32.totalorder %s20, 1
      %p164 = scmp.ne.s32.totalorder %s159, %s161
      %p165 = scmp.eq.s32.totalorder %s20, 0
      %p166 = por %p164, %p165
      %p167 = scmp.ne.s32.totalorder %s159, %s161
      %p168 = scmp.eq.s32.totalorder %s25, 1
      %p169 = por %p167, %p168
      %p170 = scmp.ne.s32.totalorder %s161, %s162
      %p171 = scmp.eq.s32.totalorder %s25, 0
      %p172 = por %p170, %p171
      %p173 = scmp.ne.s32.totalorder %s161, %s162
      %p174 = scmp.eq.s32.totalorder %s26, 1
      %p175 = por %p173, %p174
      %p177 = scmp.ne.s32.totalorder %s162, %s176
      %p178 = scmp.eq.s32.totalorder %s26, 0
      %p179 = por %p177, %p178
      %s181 = sadd.s32 %s180, 1
      %p184 = scmp.eq.s32.totalorder %s20, 1
      %p185 = scmp.ne.s32.totalorder %s180, %s182
      %p186 = scmp.eq.s32.totalorder %s20, 0
      %p187 = por %p185, %p186
      %p188 = scmp.ne.s32.totalorder %s180, %s182
      %p189 = scmp.eq.s32.totalorder %s25, 1
      %p190 = por %p188, %p189
      %p191 = scmp.ne.s32.totalorder %s182, %s183
      %p192 = scmp.eq.s32.totalorder %s25, 0
      %p193 = por %p191, %p192
      %p194 = scmp.ne.s32.totalorder %s182, %s183
      %p195 = scmp.eq.s32.totalorder %s26, 1
      %p196 = por %p194, %p195
      %p198 = scmp.ne.s32.totalorder %s183, %s197
      %p199 = scmp.eq.s32.totalorder %s26, 0
      %p200 = por %p198, %p199
      %s201 = ssub.s32 %s20, %s27
      %p202 = scmp.eq.s32.totalorder %s201, 0
      %s204 = sadd.s32 %s203, 1
      %s205 = scalar_select %p202, %s203, %s204
      %p208 = pneg %p202
      %p209 = scmp.eq.s32.totalorder %s20, 1
      %p210 = por %p208, %p209
      %p211 = scmp.ne.s32.totalorder %s203, %s206
      %p212 = scmp.eq.s32.totalorder %s20, 0
      %p213 = por %p211, %p212
      %p214 = scmp.ne.s32.totalorder %s203, %s206
      %p215 = scmp.eq.s32.totalorder %s25, 1
      %p216 = por %p214, %p215
      %p217 = scmp.ne.s32.totalorder %s206, %s207
      %p218 = scmp.eq.s32.totalorder %s25, 0
      %p219 = por %p217, %p218
      %p220 = scmp.ne.s32.totalorder %s206, %s207
      %p221 = scmp.eq.s32.totalorder %s26, 1
      %p222 = por %p220, %p221
      %p224 = scmp.ne.s32.totalorder %s207, %s223
      %p225 = scmp.eq.s32.totalorder %s26, 0
      %p226 = por %p224, %p225
      %p227 = scmp.le.s32.totalorder 1, %s20
      %p228 = scmp.lt.s32.totalorder %s20, 3
      %p229 = pnand %p227, %p228
      %p230 = pneg %p229
      // Predicated region
      $region9: #{tpu_custom_call.1} parent=5 // pred_check
        _
      $region10: #{tpu_custom_call.1} parent=5 // pred_check_branch
        %232 = sbr.rel (%p229) target = $region12
      $region11: #{tpu_custom_call.1} parent=5 // pred_region
        %s233 = ssub.s32 %s20, 1
        // Predicated region
        $region13: #{tpu_custom_call.1} parent=11 // pred_check
          %p234 = pneg %p67
        $region14: #{tpu_custom_call.1} parent=11 // pred_check_branch
          %236 = sbr.rel (%p234) target = $region16
        $region15: #{tpu_custom_call.1} parent=11 // pred_region
          %s238 = ssub.s32 512, 512
          %239 = vsyncadd [#allocation4], %s238
          %s240 = sshll.u32 [#allocation3], 4
          %s241 = int_to_ptr.vmem [resolvable:$true] %s240
          %246 = dma.hbm_to_vmem [thread:$0]  %s1, 512, %s241, [#allocation4], 256, 256, 16
        $region16: #{tpu_custom_call.1} parent=11 // pred_fallthru
          _
        // Predicated region
        $region17: #{tpu_custom_call.1} parent=11 // pred_check
          %p247 = pneg %p88
        $region18: #{tpu_custom_call.1} parent=11 // pred_check_branch
          %249 = sbr.rel (%p247) target = $region20
        $region19: #{tpu_custom_call.1} parent=11 // pred_region
          %s251 = ssub.s32 256, 256
          %252 = vsyncadd [#allocation7], %s251
          %s253 = sshll.u32 [#allocation6], 4
          %s254 = int_to_ptr.vmem [resolvable:$true] %s253
          %259 = dma.hbm_to_vmem [thread:$0]  %s2, 256, %s254, [#allocation7], 64, 64, 4
        $region20: #{tpu_custom_call.1} parent=11 // pred_fallthru
          _
        // Predicated region
        $region21: #{tpu_custom_call.1} parent=11 // pred_check
          %p260 = pneg %p109
        $region22: #{tpu_custom_call.1} parent=11 // pred_check_branch
          %262 = sbr.rel (%p260) target = $region24
        $region23: #{tpu_custom_call.1} parent=11 // pred_region
          _
        $region24: #{tpu_custom_call.1} parent=11 // pred_fallthru
          _
        // Predicated region
        $region25: #{tpu_custom_call.1} parent=11 // pred_check
          %p263 = pneg %p130
        $region26: #{tpu_custom_call.1} parent=11 // pred_check_branch
          %265 = sbr.rel (%p263) target = $region28
        $region27: #{tpu_custom_call.1} parent=11 // pred_region
          %s267 = ssub.s32 256, 256
          %268 = vsyncadd [#allocation7], %s267
          %s269 = sshll.u32 [#allocation8], 4
          %s270 = int_to_ptr.vmem [resolvable:$true] %s269
          %275 = dma.hbm_to_vmem [thread:$0]  %s4, 256, %s270, [#allocation7], 64, 64, 4
        $region28: #{tpu_custom_call.1} parent=11 // pred_fallthru
          _
        // Predicated region
        $region29: #{tpu_custom_call.1} parent=11 // pred_check
          %p276 = pneg %p151
        $region30: #{tpu_custom_call.1} parent=11 // pred_check_branch
          %278 = sbr.rel (%p276) target = $region32
        $region31: #{tpu_custom_call.1} parent=11 // pred_region
          %s280 = ssub.s32 256, 256
          %281 = vsyncadd [#allocation10], %s280
          %s282 = sshll.u32 [#allocation9], 4
          %s283 = int_to_ptr.vmem [resolvable:$true] %s282
          %288 = dma.hbm_to_vmem [thread:$0]  %s5, 256, %s283, [#allocation10], 64, 64, 4
        $region32: #{tpu_custom_call.1} parent=11 // pred_fallthru
          _
        // Predicated region
        $region33: #{tpu_custom_call.1} parent=11 // pred_check
          %p289 = pneg %p172
        $region34: #{tpu_custom_call.1} parent=11 // pred_check_branch
          %291 = sbr.rel (%p289) target = $region36
        $region35: #{tpu_custom_call.1} parent=11 // pred_region
          _
        $region36: #{tpu_custom_call.1} parent=11 // pred_fallthru
          _
        // Predicated region
        $region37: #{tpu_custom_call.1} parent=11 // pred_check
          %p292 = pneg %p193
        $region38: #{tpu_custom_call.1} parent=11 // pred_check_branch
          %294 = sbr.rel (%p292) target = $region40
        $region39: #{tpu_custom_call.1} parent=11 // pred_region
          _
        $region40: #{tpu_custom_call.1} parent=11 // pred_fallthru
          _
      $region12: #{tpu_custom_call.1} parent=5 // pred_fallthru
        _
      %p295 = scmp.lt.s32.totalorder %s20, 2
      // Predicated region
      $region41: #{tpu_custom_call.1} parent=5 // pred_check
        %p296 = pneg %p295
      $region42: #{tpu_custom_call.1} parent=5 // pred_check_branch
        %298 = sbr.rel (%p296) target = $region44
      $region43: #{tpu_custom_call.1} parent=5 // pred_region
        // Predicated region
        $region45: #{tpu_custom_call.1} parent=43 // pred_check
          %p299 = pneg %p40
        $region46: #{tpu_custom_call.1} parent=43 // pred_check_branch
          %301 = sbr.rel (%p299) target = $region48
        $region47: #{tpu_custom_call.1} parent=43 // pred_region
          %p302 = scmp.lt.s32.totalorder %s20, 1
          %s303 = scalar_select %p302, %s20, 1
          %s304 = smul.addr %s303, 2
          %s305 = smul.addr %s304, 8
          %s306 = scalar_lea.vmem %s0, %s305
        $region48: #{tpu_custom_call.1} parent=43 // pred_fallthru
          _
      $region44: #{tpu_custom_call.1} parent=5 // pred_fallthru
        _
      %p307 = scmp.le.s32.totalorder 1, %s20
      %p308 = scmp.lt.s32.totalorder %s20, 3
      %p309 = pnand %p307, %p308
      %p310 = pneg %p309
      // Predicated region
      $region49: #{tpu_custom_call.1} parent=5 // pred_check
        _
      $region50: #{tpu_custom_call.1} parent=5 // pred_check_branch
        %312 = sbr.rel (%p309) target = $region52
      $region51: #{tpu_custom_call.1} parent=5 // pred_region
        %s313 = ssub.s32 %s20, 1
        // Predicated region
        $region53: #{tpu_custom_call.1} parent=51 // pred_check
          %p314 = pneg %p67
        $region54: #{tpu_custom_call.1} parent=51 // pred_check_branch
          %316 = sbr.rel (%p314) target = $region56
        $region55: #{tpu_custom_call.1} parent=51 // pred_region
          %317 = dma.done [#allocation4], 512
        $region56: #{tpu_custom_call.1} parent=51 // pred_fallthru
          _
        // Predicated region
        $region57: #{tpu_custom_call.1} parent=51 // pred_check
          %p318 = pneg %p88
        $region58: #{tpu_custom_call.1} parent=51 // pred_check_branch
          %320 = sbr.rel (%p318) target = $region60
        $region59: #{tpu_custom_call.1} parent=51 // pred_region
          %321 = dma.done [#allocation7], 256
        $region60: #{tpu_custom_call.1} parent=51 // pred_fallthru
          _
        // Predicated region
        $region61: #{tpu_custom_call.1} parent=51 // pred_check
          %p322 = pneg %p130
        $region62: #{tpu_custom_call.1} parent=51 // pred_check_branch
          %324 = sbr.rel (%p322) target = $region64
        $region63: #{tpu_custom_call.1} parent=51 // pred_region
          %325 = dma.done [#allocation7], 256
        $region64: #{tpu_custom_call.1} parent=51 // pred_fallthru
          _
        // Predicated region
        $region65: #{tpu_custom_call.1} parent=51 // pred_check
          %p326 = pneg %p151
        $region66: #{tpu_custom_call.1} parent=51 // pred_check_branch
          %328 = sbr.rel (%p326) target = $region68
        $region67: #{tpu_custom_call.1} parent=51 // pred_region
          %329 = dma.done [#allocation10], 256
        $region68: #{tpu_custom_call.1} parent=51 // pred_fallthru
          _
        %p330 = scmp.lt.s32.totalorder %s25, 1
        %s331 = scalar_select %p330, %s25, 1
        %s332 = smul.addr %s331, 2
        %s333 = smul.addr %s332, 8
        %s334 = scalar_lea.vmem %s0, %s333
        %p335 = pneg %p46
        %p336 = pneg %p43
        %p337 = pneg %p67
        %p338 = pneg %p64
        %p339 = pneg %p88
        %p340 = pneg %p85
        %p341 = pneg %p109
        %p342 = pneg %p106
        %p343 = pneg %p130
        %p344 = pneg %p127
        %p345 = pneg %p151
        %p346 = pneg %p148
        %p347 = pneg %p172
        %p348 = pneg %p169
        %p349 = pneg %p193
        %p350 = pneg %p190
        %p351 = pneg %p219
        %p352 = pneg %p216
        %s353 = sand.u32 %s206, 1
        %s354 = scalar_lea.sflag [#allocation5], %s353
        %s355 = sand.u32 %s206, 1
        %s356 = smul.addr %s355, 16
        %s357 = scalar_lea.vmem [#allocation11], %s356
        %p358 = scmp.lt.s32.totalorder %s25, 1
        %s359 = scalar_select %p358, %s25, 1
        %s360 = smul.addr %s359, 2
        %s361 = smul.addr %s360, 8
        %s362 = scalar_lea.vmem %s0, %s361
        %v363 = vld [vmem:[#allocation3] sm:$0xff]
        %v364 = vld [vmem:[#allocation3 + $0x8] sm:$0xff]
        %v365 = vld [vmem:[#allocation3 + $0x10] sm:$0x1]
        %v366 = vld [vmem:[#allocation3 + $0x18] sm:$0x1]
        %v367 = vld [vmem:[%s362] sm:$0xf]
        %v368 = vld [vmem:[%s362 + $0x8] sm:$0xf]
        %v369 = vld [vmem:[%s362] sm:$0xf0]
        %v370 = vld [vmem:[%s362 + $0x8] sm:$0xf0]
        loop: start=0, step=1, limit=4
        $region69: #{tpu_custom_call.1} parent=51 // loop_pre_header
          _
        $region70: #{tpu_custom_call.1} parent=51 // loop_header
          %s372 = sphi 0, %s376
          %p373 = scmp.ge.s32.totalorder %s372, 4
          %v377 = vphi %v367, %v871
          %v378 = vphi %v368, %v872
          %v379 = vphi %v369, %v1286
          %v380 = vphi %v370, %v1287
        $region71: #{tpu_custom_call.1} parent=51 // loop_header_branch
          %375 = sbr.rel (%p373) target = $region75
        $region72: #{tpu_custom_call.1} parent=51 // loop_body
          %s381 = smul.u32 %s372, 4
          %s382 = scalar_lea.vmem [#allocation6], %s381
          %v383 = vld [vmem:[%s382] sm:$0xf]
          %v386 = vrot.slane %v379, 4
          %v387 = vrot.slane %v380, 4
          %390 = vrot.lane.b32.xlu0 %v386, 17
          %v391 = vpop.permute.xlu0 %390
          %392 = vrot.lane.b32.xlu0 %v387, 17
          %v393 = vpop.permute.xlu0 %392
          %v394 = vlaneseq
          %v395 = vand.u32 %v394, 127
          %vm396 = vcmp.lt.s32.totalorder %v395, 17
          %v397 = vsel %vm396, %v391, %v393
          %v398 = vsel %vm396, %v393, %v391
          %v399 = vlaneseq
          %v400 = vshrl.u32 %v399, 7
          %v401 = vsub.s32 0, %v400
          %v402 = vrot.slane %v363, %v401
          %v403 = vlaneseq
          %v404 = vshrl.u32 %v403, 7
          %v405 = vsub.s32 0, %v404
          %v406 = vrot.slane %v364, %v405
          %v407 = vmul.f32 %v398, %v402
          %v408 = vmul.f32 %v397, %v406
          %409 = vst [vmem:[#allocation2] sm:$0xf] %v407
          %410 = vst [vmem:[#allocation2 + $0x8] sm:$0xf] %v408
          %411 = vrot.lane.b32.xlu0 %v386, 16
          %v412 = vpop.permute.xlu0 %411
          %413 = vrot.lane.b32.xlu0 %v387, 16
          %v414 = vpop.permute.xlu0 %413
          %vm415 = vcmp.lt.s32.totalorder %v395, 16
          %v416 = vsel %vm415, %v412, %v414
          %v417 = vsel %vm415, %v414, %v412
          %v418 = vlaneseq
          %v419 = vshrl.u32 %v418, 7
          %v420 = vsub.s32 1, %v419
          %v421 = vrot.slane %v363, %v420
          %v422 = vlaneseq
          %v423 = vshrl.u32 %v422, 7
          %v424 = vsub.s32 1, %v423
          %v425 = vrot.slane %v364, %v424
          %v426 = vmul.f32 %v417, %v421
          %v427 = vmul.f32 %v416, %v425
          %v430 = vrot.slane %v426, 4
          %v431 = vrot.slane %v427, 4
          %434 = vst [vmem:[#allocation2] sm:$0xf0] %v430
          %435 = vst [vmem:[#allocation2 + $0x8] sm:$0xf0] %v431
          %436 = vrot.lane.b32.xlu0 %v386, 15
          %v437 = vpop.permute.xlu0 %436
          %438 = vrot.lane.b32.xlu0 %v387, 15
          %v439 = vpop.permute.xlu0 %438
          %vm440 = vcmp.lt.s32.totalorder %v395, 15
          %v441 = vsel %vm440, %v437, %v439
          %v442 = vsel %vm440, %v439, %v437
          %v443 = vlaneseq
          %v444 = vshrl.u32 %v443, 7
          %v445 = vsub.s32 2, %v444
          %v446 = vrot.slane %v363, %v445
          %v447 = vlaneseq
          %v448 = vshrl.u32 %v447, 7
          %v449 = vsub.s32 2, %v448
          %v450 = vrot.slane %v364, %v449
          %v451 = vmul.f32 %v442, %v446
          %v452 = vmul.f32 %v441, %v450
          %453 = vst [vmem:[#allocation2 + $0x10] sm:$0xf] %v451
          %454 = vst [vmem:[#allocation2 + $0x18] sm:$0xf] %v452
          %455 = vrot.lane.b32.xlu0 %v386, 1
          %v456 = vpop.permute.xlu0 %455
          %457 = vrot.lane.b32.xlu0 %v387, 1
          %v458 = vpop.permute.xlu0 %457
          %vm459 = vcmp.lt.s32.totalorder %v395, 1
          %v460 = vsel %vm459, %v456, %v458
          %v461 = vsel %vm459, %v458, %v456
          %v462 = vlaneseq
          %v463 = vshrl.u32 %v462, 7
          %v464 = vsub.s32 3, %v463
          %v465 = vrot.slane %v363, %v464
          %v466 = vlaneseq
          %v467 = vshrl.u32 %v466, 7
          %v468 = vsub.s32 3, %v467
          %v469 = vrot.slane %v364, %v468
          %v470 = vmul.f32 %v461, %v465
          %v471 = vmul.f32 %v460, %v469
          %v474 = vrot.slane %v470, 4
          %v475 = vrot.slane %v471, 4
          %478 = vst [vmem:[#allocation2 + $0x10] sm:$0xf0] %v474
          %479 = vst [vmem:[#allocation2 + $0x18] sm:$0xf0] %v475
          %480 = vst [vmem:[#allocation2 + $0x20] sm:$0xf] %v386
          %481 = vst [vmem:[#allocation2 + $0x28] sm:$0xf] %v387
          %482 = vrot.lane.b32.xlu0 %v386, 127
          %v483 = vpop.permute.xlu0 %482
          %484 = vrot.lane.b32.xlu0 %v387, 127
          %v485 = vpop.permute.xlu0 %484
          %vm486 = vcmp.lt.s32.totalorder %v395, 127
          %v487 = vsel %vm486, %v483, %v485
          %v488 = vsel %vm486, %v485, %v483
          %v489 = vlaneseq
          %v490 = vshrl.u32 %v489, 7
          %v491 = vsub.s32 5, %v490
          %v492 = vrot.slane %v363, %v491
          %v493 = vlaneseq
          %v494 = vshrl.u32 %v493, 7
          %v495 = vsub.s32 5, %v494
          %v496 = vrot.slane %v364, %v495
          %v497 = vmul.f32 %v487, %v492
          %v498 = vmul.f32 %v488, %v496
          %v501 = vrot.slane %v497, 4
          %v502 = vrot.slane %v498, 4
          %505 = vst [vmem:[#allocation2 + $0x20] sm:$0xf0] %v501
          %506 = vst [vmem:[#allocation2 + $0x28] sm:$0xf0] %v502
          %507 = vrot.lane.b32.xlu0 %v386, 113
          %v508 = vpop.permute.xlu0 %507
          %509 = vrot.lane.b32.xlu0 %v387, 113
          %v510 = vpop.permute.xlu0 %509
          %vm511 = vcmp.lt.s32.totalorder %v395, 113
          %v512 = vsel %vm511, %v508, %v510
          %v513 = vsel %vm511, %v510, %v508
          %v514 = vlaneseq
          %v515 = vshrl.u32 %v514, 7
          %v516 = vsub.s32 6, %v515
          %v517 = vrot.slane %v363, %v516
          %v518 = vlaneseq
          %v519 = vshrl.u32 %v518, 7
          %v520 = vsub.s32 6, %v519
          %v521 = vrot.slane %v364, %v520
          %v522 = vmul.f32 %v512, %v517
          %v523 = vmul.f32 %v513, %v521
          %524 = vst [vmem:[#allocation2 + $0x30] sm:$0xf] %v522
          %525 = vst [vmem:[#allocation2 + $0x38] sm:$0xf] %v523
          %526 = vrot.lane.b32.xlu0 %v386, 112
          %v527 = vpop.permute.xlu0 %526
          %528 = vrot.lane.b32.xlu0 %v387, 112
          %v529 = vpop.permute.xlu0 %528
          %vm530 = vcmp.lt.s32.totalorder %v395, 112
          %v531 = vsel %vm530, %v527, %v529
          %v532 = vsel %vm530, %v529, %v527
          %v533 = vlaneseq
          %v534 = vshrl.u32 %v533, 7
          %v535 = vsub.s32 7, %v534
          %v536 = vrot.slane %v363, %v535
          %v537 = vlaneseq
          %v538 = vshrl.u32 %v537, 7
          %v539 = vsub.s32 7, %v538
          %v540 = vrot.slane %v364, %v539
          %v541 = vmul.f32 %v531, %v536
          %v542 = vmul.f32 %v532, %v540
          %v545 = vrot.slane %v541, 4
          %v546 = vrot.slane %v542, 4
          %549 = vst [vmem:[#allocation2 + $0x30] sm:$0xf0] %v545
          %550 = vst [vmem:[#allocation2 + $0x38] sm:$0xf0] %v546
          %551 = vrot.lane.b32.xlu0 %v386, 111
          %v552 = vpop.permute.xlu0 %551
          %553 = vrot.lane.b32.xlu0 %v387, 111
          %v554 = vpop.permute.xlu0 %553
          %vm555 = vcmp.lt.s32.totalorder %v395, 111
          %v556 = vsel %vm555, %v552, %v554
          %v557 = vsel %vm555, %v554, %v552
          %v558 = vlaneseq
          %v559 = vshrl.u32 %v558, 7
          %v560 = vsub.s32 0, %v559
          %v561 = vrot.slane %v365, %v560
          %v562 = vlaneseq
          %v563 = vshrl.u32 %v562, 7
          %v564 = vsub.s32 0, %v563
          %v565 = vrot.slane %v366, %v564
          %v566 = vmul.f32 %v556, %v561
          %v567 = vmul.f32 %v557, %v565
          %568 = vst [vmem:[#allocation2 + $0x40] sm:$0xf] %v566
          %569 = vst [vmem:[#allocation2 + $0x48] sm:$0xf] %v567
          %v570 = vld [vmem:[#allocation2] sm:$0xff]
          %v571 = vld [vmem:[#allocation2 + $0x8] sm:$0xff]
          %v572 = vld [vmem:[#allocation2 + $0x10] sm:$0xff]
          %v573 = vld [vmem:[#allocation2 + $0x18] sm:$0xff]
          %v574 = vld [vmem:[#allocation2 + $0x20] sm:$0xff]
          %v575 = vld [vmem:[#allocation2 + $0x28] sm:$0xff]
          %v576 = vld [vmem:[#allocation2 + $0x30] sm:$0xff]
          %v577 = vld [vmem:[#allocation2 + $0x38] sm:$0xff]
          %v578 = vld [vmem:[#allocation2 + $0x40] sm:$0xf]
          %v579 = vld [vmem:[#allocation2 + $0x48] sm:$0xf]
          %s580 = scalar_lea.vmem %s6, %s381
          %v581 = vld [vmem:[%s580] sm:$0xf]
          %583 = vset.pattern.permute.xlu0 0
          %584 = vperm.xlu0 %583, %v581
          %v585 = vpop.permute.xlu0 %584
          %vm587 = vcmask 293888
          %v589 = vsel %vm587, %v383, 0
          %vm591 = vcmask 1043456
          %v593 = vsel %vm591, %v578, 0
          %v596 = vsel %vm591, %v579, 0
          %598 = vmatprep.subr.mxu0 %v571
          %599 = vmatpush1.msra.mxu0 %v570
          %600 = vmatprep.subr.mxu0 %v573
          %601 = vmatpush1.msra.mxu0 %v572
          %602 = vmatprep.subr.mxu0 %v575
          %603 = vmatpush1.msra.mxu0 %v574
          %604 = vmatprep.subr.mxu0 %v577
          %605 = vmatpush1.msra.mxu0 %v576
          %606 = vmatprep.subr.mxu0 %v596
          %607 = vmatpush1.msra.mxu0 %v593
          %608 = vmatprep.subr.mxu0 0.0
          %609 = vmatpush1.msra.mxu0 0.0
          %610 = vmatprep.subr.mxu0 0.0
          %611 = vmatpush1.msra.mxu0 0.0
          %612 = vmatprep.subr.mxu0 0.0
          %613 = vmatpush1.msra.mxu0 0.0
          %614 = vmatprep.subr.mxu0 0.0
          %615 = vmatpush1.msra.mxu0 0.0
          %616 = vmatprep.subr.mxu0 0.0
          %617 = vmatpush1.msra.mxu0 0.0
          %618 = vmatprep.subr.mxu0 0.0
          %619 = vmatpush1.msra.mxu0 0.0
          %620 = vmatprep.subr.mxu0 0.0
          %621 = vmatpush1.msra.mxu0 0.0
          %622 = vmatprep.subr.mxu0 0.0
          %623 = vmatpush1.msra.mxu0 0.0
          %624 = vmatprep.subr.mxu0 0.0
          %625 = vmatpush1.msra.mxu0 0.0
          %626 = vmatprep.subr.mxu0 0.0
          %627 = vmatpush1.msra.mxu0 0.0
          %628 = vmatprep.subr.mxu0 0.0
          %629 = vmatpush1.msra.mxu0 0.0
          %630 = vmatprep.subr.mxu0 0.0
          %631 = vmatpush1.msra.mxu0 0.0
          %632 = vmatprep.subr.mxu0 0.0
          %633 = vmatpush1.msra.mxu0 0.0
          %634 = vmatprep.subr.mxu0 0.0
          %635 = vmatpush1.msra.mxu0 0.0
          %636 = vmatprep.subr.mxu0 0.0
          %637 = vmatpush1.msra.mxu0 0.0
          %638 = vmatprep.subr.mxu0 0.0
          %639 = vmatpush1.msra.mxu0 0.0
          %640 = vmatprep.subr.mxu0 0.0
          %641 = vmatpush1.msra.mxu0 0.0
          %642 = vmatprep.subr.mxu0 0.0
          %643 = vmatpush1.msra.mxu0 0.0
          %644 = vmatprep.subr.mxu0 0.0
          %645 = vmatpush1.msra.mxu0 0.0
          %646 = vmatprep.subr.mxu0 0.0
          %647 = vmatpush1.msra.mxu0 0.0
          %648 = vmatprep.subr.mxu0 0.0
          %649 = vmatpush1.msra.mxu0 0.0
          %650 = vmatprep.subr.mxu0 0.0
          %651 = vmatpush1.msra.mxu0 0.0
          %652 = vmatprep.subr.mxu0 0.0
          %653 = vmatpush1.msra.mxu0 0.0
          %654 = vmatprep.subr.mxu0 0.0
          %655 = vmatpush1.msra.mxu0 0.0
          %656 = vmatprep.subr.mxu0 0.0
          %657 = vmatpush1.msra.mxu0 0.0
          %658 = vmatprep.subr.mxu0 0.0
          %659 = vmatpush1.msra.mxu0 0.0
          %660 = vmatprep.subr.mxu0 0.0
          %661 = vmatpush1.msra.mxu0 0.0
          %662 = vmatprep.mubr.f32.mxu0 0.0
          %663 = vmatmul.mubr.f32.gmra.mrb[0].mxu0 %v589
          %v664 = vpop.f32.mrb[0].mxu0
          %v665 = vadd.f32 %v585, %v664
          %v666 = vpop.f32.mrb[0].mxu0
          %v667 = vadd.f32 %v585, %v666
          %668 = vdwg.mxu0
          %v669 = vmax.f32 %v665, 0.0
          %v670 = vmax.f32 %v667, 0.0
          %s671 = scalar_lea.vmem %s3, %s381
          %v672 = vld [vmem:[%s671] sm:$0xf]
          %673 = vrot.lane.b32.xlu0 %v669, 17
          %v674 = vpop.permute.xlu0 %673
          %675 = vrot.lane.b32.xlu0 %v670, 17
          %v676 = vpop.permute.xlu0 %675
          %v677 = vsel %vm396, %v674, %v676
          %v678 = vsel %vm396, %v676, %v674
          %v679 = vmul.f32 %v678, %v402
          %v680 = vmul.f32 %v677, %v406
          %681 = vst [vmem:[#allocation2] sm:$0xf] %v679
          %682 = vst [vmem:[#allocation2 + $0x8] sm:$0xf] %v680
          %683 = vrot.lane.b32.xlu0 %v669, 16
          %v684 = vpop.permute.xlu0 %683
          %685 = vrot.lane.b32.xlu0 %v670, 16
          %v686 = vpop.permute.xlu0 %685
          %v687 = vsel %vm415, %v684, %v686
          %v688 = vsel %vm415, %v686, %v684
          %v689 = vmul.f32 %v688, %v421
          %v690 = vmul.f32 %v687, %v425
          %v693 = vrot.slane %v689, 4
          %v694 = vrot.slane %v690, 4
          %697 = vst [vmem:[#allocation2] sm:$0xf0] %v693
          %698 = vst [vmem:[#allocation2 + $0x8] sm:$0xf0] %v694
          %699 = vrot.lane.b32.xlu0 %v669, 15
          %v700 = vpop.permute.xlu0 %699
          %701 = vrot.lane.b32.xlu0 %v670, 15
          %v702 = vpop.permute.xlu0 %701
          %v703 = vsel %vm440, %v700, %v702
          %v704 = vsel %vm440, %v702, %v700
          %v705 = vmul.f32 %v704, %v446
          %v706 = vmul.f32 %v703, %v450
          %707 = vst [vmem:[#allocation2 + $0x10] sm:$0xf] %v705
          %708 = vst [vmem:[#allocation2 + $0x18] sm:$0xf] %v706
          %709 = vrot.lane.b32.xlu0 %v669, 1
          %v710 = vpop.permute.xlu0 %709
          %711 = vrot.lane.b32.xlu0 %v670, 1
          %v712 = vpop.permute.xlu0 %711
          %v713 = vsel %vm459, %v710, %v712
          %v714 = vsel %vm459, %v712, %v710
          %v715 = vmul.f32 %v714, %v465
          %v716 = vmul.f32 %v713, %v469
          %v719 = vrot.slane %v715, 4
          %v720 = vrot.slane %v716, 4
          %723 = vst [vmem:[#allocation2 + $0x10] sm:$0xf0] %v719
          %724 = vst [vmem:[#allocation2 + $0x18] sm:$0xf0] %v720
          %725 = vst [vmem:[#allocation2 + $0x20] sm:$0xf] %v669
          %726 = vst [vmem:[#allocation2 + $0x28] sm:$0xf] %v670
          %727 = vrot.lane.b32.xlu0 %v669, 127
          %v728 = vpop.permute.xlu0 %727
          %729 = vrot.lane.b32.xlu0 %v670, 127
          %v730 = vpop.permute.xlu0 %729
          %v731 = vsel %vm486, %v728, %v730
          %v732 = vsel %vm486, %v730, %v728
          %v733 = vmul.f32 %v731, %v492
          %v734 = vmul.f32 %v732, %v496
          %v737 = vrot.slane %v733, 4
          %v738 = vrot.slane %v734, 4
          %741 = vst [vmem:[#allocation2 + $0x20] sm:$0xf0] %v737
          %742 = vst [vmem:[#allocation2 + $0x28] sm:$0xf0] %v738
          %743 = vrot.lane.b32.xlu0 %v669, 113
          %v744 = vpop.permute.xlu0 %743
          %745 = vrot.lane.b32.xlu0 %v670, 113
          %v746 = vpop.permute.xlu0 %745
          %v747 = vsel %vm511, %v744, %v746
          %v748 = vsel %vm511, %v746, %v744
          %v749 = vmul.f32 %v747, %v517
          %v750 = vmul.f32 %v748, %v521
          %751 = vst [vmem:[#allocation2 + $0x30] sm:$0xf] %v749
          %752 = vst [vmem:[#allocation2 + $0x38] sm:$0xf] %v750
          %753 = vrot.lane.b32.xlu0 %v669, 112
          %v754 = vpop.permute.xlu0 %753
          %755 = vrot.lane.b32.xlu0 %v670, 112
          %v756 = vpop.permute.xlu0 %755
          %v757 = vsel %vm530, %v754, %v756
          %v758 = vsel %vm530, %v756, %v754
          %v759 = vmul.f32 %v757, %v536
          %v760 = vmul.f32 %v758, %v540
          %v763 = vrot.slane %v759, 4
          %v764 = vrot.slane %v760, 4
          %767 = vst [vmem:[#allocation2 + $0x30] sm:$0xf0] %v763
          %768 = vst [vmem:[#allocation2 + $0x38] sm:$0xf0] %v764
          %769 = vrot.lane.b32.xlu0 %v669, 111
          %v770 = vpop.permute.xlu0 %769
          %771 = vrot.lane.b32.xlu0 %v670, 111
          %v772 = vpop.permute.xlu0 %771
          %v773 = vsel %vm555, %v770, %v772
          %v774 = vsel %vm555, %v772, %v770
          %v775 = vmul.f32 %v773, %v561
          %v776 = vmul.f32 %v774, %v565
          %777 = vst [vmem:[#allocation2 + $0x40] sm:$0xf] %v775
          %778 = vst [vmem:[#allocation2 + $0x48] sm:$0xf] %v776
          %v779 = vld [vmem:[#allocation2] sm:$0xff]
          %v780 = vld [vmem:[#allocation2 + $0x8] sm:$0xff]
          %v781 = vld [vmem:[#allocation2 + $0x10] sm:$0xff]
          %v782 = vld [vmem:[#allocation2 + $0x18] sm:$0xff]
          %v783 = vld [vmem:[#allocation2 + $0x20] sm:$0xff]
          %v784 = vld [vmem:[#allocation2 + $0x28] sm:$0xff]
          %v785 = vld [vmem:[#allocation2 + $0x30] sm:$0xff]
          %v786 = vld [vmem:[#allocation2 + $0x38] sm:$0xff]
          %v787 = vld [vmem:[#allocation2 + $0x40] sm:$0xf]
          %v788 = vld [vmem:[#allocation2 + $0x48] sm:$0xf]
          %v790 = vsel %vm587, %v672, 0
          %v793 = vsel %vm591, %v787, 0
          %v796 = vsel %vm591, %v788, 0
          %798 = vmatprep.subr.mxu0 %v780
          %799 = vmatpush1.msra.mxu0 %v779
          %800 = vmatprep.subr.mxu0 %v782
          %801 = vmatpush1.msra.mxu0 %v781
          %802 = vmatprep.subr.mxu0 %v784
          %803 = vmatpush1.msra.mxu0 %v783
          %804 = vmatprep.subr.mxu0 %v786
          %805 = vmatpush1.msra.mxu0 %v785
          %806 = vmatprep.subr.mxu0 %v796
          %807 = vmatpush1.msra.mxu0 %v793
          %808 = vmatprep.subr.mxu0 0.0
          %809 = vmatpush1.msra.mxu0 0.0
          %810 = vmatprep.subr.mxu0 0.0
          %811 = vmatpush1.msra.mxu0 0.0
          %812 = vmatprep.subr.mxu0 0.0
          %813 = vmatpush1.msra.mxu0 0.0
          %814 = vmatprep.subr.mxu0 0.0
          %815 = vmatpush1.msra.mxu0 0.0
          %816 = vmatprep.subr.mxu0 0.0
          %817 = vmatpush1.msra.mxu0 0.0
          %818 = vmatprep.subr.mxu0 0.0
          %819 = vmatpush1.msra.mxu0 0.0
          %820 = vmatprep.subr.mxu0 0.0
          %821 = vmatpush1.msra.mxu0 0.0
          %822 = vmatprep.subr.mxu0 0.0
          %823 = vmatpush1.msra.mxu0 0.0
          %824 = vmatprep.subr.mxu0 0.0
          %825 = vmatpush1.msra.mxu0 0.0
          %826 = vmatprep.subr.mxu0 0.0
          %827 = vmatpush1.msra.mxu0 0.0
          %828 = vmatprep.subr.mxu0 0.0
          %829 = vmatpush1.msra.mxu0 0.0
          %830 = vmatprep.subr.mxu0 0.0
          %831 = vmatpush1.msra.mxu0 0.0
          %832 = vmatprep.subr.mxu0 0.0
          %833 = vmatpush1.msra.mxu0 0.0
          %834 = vmatprep.subr.mxu0 0.0
          %835 = vmatpush1.msra.mxu0 0.0
          %836 = vmatprep.subr.mxu0 0.0
          %837 = vmatpush1.msra.mxu0 0.0
          %838 = vmatprep.subr.mxu0 0.0
          %839 = vmatpush1.msra.mxu0 0.0
          %840 = vmatprep.subr.mxu0 0.0
          %841 = vmatpush1.msra.mxu0 0.0
          %842 = vmatprep.subr.mxu0 0.0
          %843 = vmatpush1.msra.mxu0 0.0
          %844 = vmatprep.subr.mxu0 0.0
          %845 = vmatpush1.msra.mxu0 0.0
          %846 = vmatprep.subr.mxu0 0.0
          %847 = vmatpush1.msra.mxu0 0.0
          %848 = vmatprep.subr.mxu0 0.0
          %849 = vmatpush1.msra.mxu0 0.0
          %850 = vmatprep.subr.mxu0 0.0
          %851 = vmatpush1.msra.mxu0 0.0
          %852 = vmatprep.subr.mxu0 0.0
          %853 = vmatpush1.msra.mxu0 0.0
          %854 = vmatprep.subr.mxu0 0.0
          %855 = vmatpush1.msra.mxu0 0.0
          %856 = vmatprep.subr.mxu0 0.0
          %857 = vmatpush1.msra.mxu0 0.0
          %858 = vmatprep.subr.mxu0 0.0
          %859 = vmatpush1.msra.mxu0 0.0
          %860 = vmatprep.subr.mxu0 0.0
          %861 = vmatpush1.msra.mxu0 0.0
          %862 = vmatprep.mubr.f32.mxu0 0.0
          %863 = vmatmul.mubr.f32.gmra.mrb[0].mxu0 %v790
          %v864 = vpop.f32.mrb[0].mxu0
          %v865 = vadd.f32 0.0, %v864
          %v866 = vpop.f32.mrb[0].mxu0
          %v867 = vadd.f32 0.0, %v866
          %868 = vdwg.mxu0
          %v869 = vmul.f32 %v865, 0.1
          %v870 = vmul.f32 %v867, 0.1
          %v871 = vadd.f32 %v377, %v869
          %v872 = vadd.f32 %v378, %v870
          %s873 = scalar_lea.vmem [#allocation8], %s381
          %v874 = vld [vmem:[%s873] sm:$0xf]
          %875 = vrot.lane.b32.xlu0 %v871, 17
          %v876 = vpop.permute.xlu0 %875
          %877 = vrot.lane.b32.xlu0 %v872, 17
          %v878 = vpop.permute.xlu0 %877
          %v879 = vsel %vm396, %v876, %v878
          %v880 = vsel %vm396, %v878, %v876
          %v881 = vmul.f32 %v880, %v402
          %v882 = vmul.f32 %v879, %v406
          %883 = vst [vmem:[#allocation2] sm:$0xf] %v881
          %884 = vst [vmem:[#allocation2 + $0x8] sm:$0xf] %v882
          %885 = vrot.lane.b32.xlu0 %v871, 16
          %v886 = vpop.permute.xlu0 %885
          %887 = vrot.lane.b32.xlu0 %v872, 16
          %v888 = vpop.permute.xlu0 %887
          %v889 = vsel %vm415, %v886, %v888
          %v890 = vsel %vm415, %v888, %v886
          %v891 = vmul.f32 %v890, %v421
          %v892 = vmul.f32 %v889, %v425
          %v895 = vrot.slane %v891, 4
          %v896 = vrot.slane %v892, 4
          %899 = vst [vmem:[#allocation2] sm:$0xf0] %v895
          %900 = vst [vmem:[#allocation2 + $0x8] sm:$0xf0] %v896
          %901 = vrot.lane.b32.xlu0 %v871, 15
          %v902 = vpop.permute.xlu0 %901
          %903 = vrot.lane.b32.xlu0 %v872, 15
          %v904 = vpop.permute.xlu0 %903
          %v905 = vsel %vm440, %v902, %v904
          %v906 = vsel %vm440, %v904, %v902
          %v907 = vmul.f32 %v906, %v446
          %v908 = vmul.f32 %v905, %v450
          %909 = vst [vmem:[#allocation2 + $0x10] sm:$0xf] %v907
          %910 = vst [vmem:[#allocation2 + $0x18] sm:$0xf] %v908
          %911 = vrot.lane.b32.xlu0 %v871, 1
          %v912 = vpop.permute.xlu0 %911
          %913 = vrot.lane.b32.xlu0 %v872, 1
          %v914 = vpop.permute.xlu0 %913
          %v915 = vsel %vm459, %v912, %v914
          %v916 = vsel %vm459, %v914, %v912
          %v917 = vmul.f32 %v916, %v465
          %v918 = vmul.f32 %v915, %v469
          %v921 = vrot.slane %v917, 4
          %v922 = vrot.slane %v918, 4
          %925 = vst [vmem:[#allocation2 + $0x10] sm:$0xf0] %v921
          %926 = vst [vmem:[#allocation2 + $0x18] sm:$0xf0] %v922
          %927 = vst [vmem:[#allocation2 + $0x20] sm:$0xf] %v871
          %928 = vst [vmem:[#allocation2 + $0x28] sm:$0xf] %v872
          %929 = vrot.lane.b32.xlu0 %v871, 127
          %v930 = vpop.permute.xlu0 %929
          %931 = vrot.lane.b32.xlu0 %v872, 127
          %v932 = vpop.permute.xlu0 %931
          %v933 = vsel %vm486, %v930, %v932
          %v934 = vsel %vm486, %v932, %v930
          %v935 = vmul.f32 %v933, %v492
          %v936 = vmul.f32 %v934, %v496
          %v939 = vrot.slane %v935, 4
          %v940 = vrot.slane %v936, 4
          %943 = vst [vmem:[#allocation2 + $0x20] sm:$0xf0] %v939
          %944 = vst [vmem:[#allocation2 + $0x28] sm:$0xf0] %v940
          %945 = vrot.lane.b32.xlu0 %v871, 113
          %v946 = vpop.permute.xlu0 %945
          %947 = vrot.lane.b32.xlu0 %v872, 113
          %v948 = vpop.permute.xlu0 %947
          %v949 = vsel %vm511, %v946, %v948
          %v950 = vsel %vm511, %v948, %v946
          %v951 = vmul.f32 %v949, %v517
          %v952 = vmul.f32 %v950, %v521
          %953 = vst [vmem:[#allocation2 + $0x30] sm:$0xf] %v951
          %954 = vst [vmem:[#allocation2 + $0x38] sm:$0xf] %v952
          %955 = vrot.lane.b32.xlu0 %v871, 112
          %v956 = vpop.permute.xlu0 %955
          %957 = vrot.lane.b32.xlu0 %v872, 112
          %v958 = vpop.permute.xlu0 %957
          %v959 = vsel %vm530, %v956, %v958
          %v960 = vsel %vm530, %v958, %v956
          %v961 = vmul.f32 %v959, %v536
          %v962 = vmul.f32 %v960, %v540
          %v965 = vrot.slane %v961, 4
          %v966 = vrot.slane %v962, 4
          %969 = vst [vmem:[#allocation2 + $0x30] sm:$0xf0] %v965
          %970 = vst [vmem:[#allocation2 + $0x38] sm:$0xf0] %v966
          %971 = vrot.lane.b32.xlu0 %v871, 111
          %v972 = vpop.permute.xlu0 %971
          %973 = vrot.lane.b32.xlu0 %v872, 111
          %v974 = vpop.permute.xlu0 %973
          %v975 = vsel %vm555, %v972, %v974
          %v976 = vsel %vm555, %v974, %v972
          %v977 = vmul.f32 %v975, %v561
          %v978 = vmul.f32 %v976, %v565
          %979 = vst [vmem:[#allocation2 + $0x40] sm:$0xf] %v977
          %980 = vst [vmem:[#allocation2 + $0x48] sm:$0xf] %v978
          %v981 = vld [vmem:[#allocation2] sm:$0xff]
          %v982 = vld [vmem:[#allocation2 + $0x8] sm:$0xff]
          %v983 = vld [vmem:[#allocation2 + $0x10] sm:$0xff]
          %v984 = vld [vmem:[#allocation2 + $0x18] sm:$0xff]
          %v985 = vld [vmem:[#allocation2 + $0x20] sm:$0xff]
          %v986 = vld [vmem:[#allocation2 + $0x28] sm:$0xff]
          %v987 = vld [vmem:[#allocation2 + $0x30] sm:$0xff]
          %v988 = vld [vmem:[#allocation2 + $0x38] sm:$0xff]
          %v989 = vld [vmem:[#allocation2 + $0x40] sm:$0xf]
          %v990 = vld [vmem:[#allocation2 + $0x48] sm:$0xf]
          %s991 = scalar_lea.vmem %s7, %s381
          %v992 = vld [vmem:[%s991] sm:$0xf]
          %994 = vset.pattern.permute.xlu0 0
          %995 = vperm.xlu0 %994, %v992
          %v996 = vpop.permute.xlu0 %995
          %v999 = vsel %vm587, %v874, 0
          %v1002 = vsel %vm591, %v989, 0
          %v1005 = vsel %vm591, %v990, 0
          %1007 = vmatprep.subr.mxu0 %v982
          %1008 = vmatpush1.msra.mxu0 %v981
          %1009 = vmatprep.subr.mxu0 %v984
          %1010 = vmatpush1.msra.mxu0 %v983
          %1011 = vmatprep.subr.mxu0 %v986
          %1012 = vmatpush1.msra.mxu0 %v985
          %1013 = vmatprep.subr.mxu0 %v988
          %1014 = vmatpush1.msra.mxu0 %v987
          %1015 = vmatprep.subr.mxu0 %v1005
          %1016 = vmatpush1.msra.mxu0 %v1002
          %1017 = vmatprep.subr.mxu0 0.0
          %1018 = vmatpush1.msra.mxu0 0.0
          %1019 = vmatprep.subr.mxu0 0.0
          %1020 = vmatpush1.msra.mxu0 0.0
          %1021 = vmatprep.subr.mxu0 0.0
          %1022 = vmatpush1.msra.mxu0 0.0
          %1023 = vmatprep.subr.mxu0 0.0
          %1024 = vmatpush1.msra.mxu0 0.0
          %1025 = vmatprep.subr.mxu0 0.0
          %1026 = vmatpush1.msra.mxu0 0.0
          %1027 = vmatprep.subr.mxu0 0.0
          %1028 = vmatpush1.msra.mxu0 0.0
          %1029 = vmatprep.subr.mxu0 0.0
          %1030 = vmatpush1.msra.mxu0 0.0
          %1031 = vmatprep.subr.mxu0 0.0
          %1032 = vmatpush1.msra.mxu0 0.0
          %1033 = vmatprep.subr.mxu0 0.0
          %1034 = vmatpush1.msra.mxu0 0.0
          %1035 = vmatprep.subr.mxu0 0.0
          %1036 = vmatpush1.msra.mxu0 0.0
          %1037 = vmatprep.subr.mxu0 0.0
          %1038 = vmatpush1.msra.mxu0 0.0
          %1039 = vmatprep.subr.mxu0 0.0
          %1040 = vmatpush1.msra.mxu0 0.0
          %1041 = vmatprep.subr.mxu0 0.0
          %1042 = vmatpush1.msra.mxu0 0.0
          %1043 = vmatprep.subr.mxu0 0.0
          %1044 = vmatpush1.msra.mxu0 0.0
          %1045 = vmatprep.subr.mxu0 0.0
          %1046 = vmatpush1.msra.mxu0 0.0
          %1047 = vmatprep.subr.mxu0 0.0
          %1048 = vmatpush1.msra.mxu0 0.0
          %1049 = vmatprep.subr.mxu0 0.0
          %1050 = vmatpush1.msra.mxu0 0.0
          %1051 = vmatprep.subr.mxu0 0.0
          %1052 = vmatpush1.msra.mxu0 0.0
          %1053 = vmatprep.subr.mxu0 0.0
          %1054 = vmatpush1.msra.mxu0 0.0
          %1055 = vmatprep.subr.mxu0 0.0
          %1056 = vmatpush1.msra.mxu0 0.0
          %1057 = vmatprep.subr.mxu0 0.0
          %1058 = vmatpush1.msra.mxu0 0.0
          %1059 = vmatprep.subr.mxu0 0.0
          %1060 = vmatpush1.msra.mxu0 0.0
          %1061 = vmatprep.subr.mxu0 0.0
          %1062 = vmatpush1.msra.mxu0 0.0
          %1063 = vmatprep.subr.mxu0 0.0
          %1064 = vmatpush1.msra.mxu0 0.0
          %1065 = vmatprep.subr.mxu0 0.0
          %1066 = vmatpush1.msra.mxu0 0.0
          %1067 = vmatprep.subr.mxu0 0.0
          %1068 = vmatpush1.msra.mxu0 0.0
          %1069 = vmatprep.subr.mxu0 0.0
          %1070 = vmatpush1.msra.mxu0 0.0
          %1071 = vmatprep.mubr.f32.mxu0 0.0
          %1072 = vmatmul.mubr.f32.gmra.mrb[0].mxu0 %v999
          %v1073 = vpop.f32.mrb[0].mxu0
          %v1074 = vadd.f32 %v996, %v1073
          %v1075 = vpop.f32.mrb[0].mxu0
          %v1076 = vadd.f32 %v996, %v1075
          %1077 = vdwg.mxu0
          %v1078 = vmax.f32 %v1074, 0.0
          %v1079 = vmax.f32 %v1076, 0.0
          %s1080 = scalar_lea.vmem [#allocation9], %s381
          %v1081 = vld [vmem:[%s1080] sm:$0xf]
          %1082 = vrot.lane.b32.xlu0 %v1078, 17
          %v1083 = vpop.permute.xlu0 %1082
          %1084 = vrot.lane.b32.xlu0 %v1079, 17
          %v1085 = vpop.permute.xlu0 %1084
          %v1086 = vsel %vm396, %v1083, %v1085
          %v1087 = vsel %vm396, %v1085, %v1083
          %v1088 = vmul.f32 %v1087, %v402
          %v1089 = vmul.f32 %v1086, %v406
          %1090 = vst [vmem:[#allocation2] sm:$0xf] %v1088
          %1091 = vst [vmem:[#allocation2 + $0x8] sm:$0xf] %v1089
          %1092 = vrot.lane.b32.xlu0 %v1078, 16
          %v1093 = vpop.permute.xlu0 %1092
          %1094 = vrot.lane.b32.xlu0 %v1079, 16
          %v1095 = vpop.permute.xlu0 %1094
          %v1096 = vsel %vm415, %v1093, %v1095
          %v1097 = vsel %vm415, %v1095, %v1093
          %v1098 = vmul.f32 %v1097, %v421
          %v1099 = vmul.f32 %v1096, %v425
          %v1102 = vrot.slane %v1098, 4
          %v1103 = vrot.slane %v1099, 4
          %1106 = vst [vmem:[#allocation2] sm:$0xf0] %v1102
          %1107 = vst [vmem:[#allocation2 + $0x8] sm:$0xf0] %v1103
          %1108 = vrot.lane.b32.xlu0 %v1078, 15
          %v1109 = vpop.permute.xlu0 %1108
          %1110 = vrot.lane.b32.xlu0 %v1079, 15
          %v1111 = vpop.permute.xlu0 %1110
          %v1112 = vsel %vm440, %v1109, %v1111
          %v1113 = vsel %vm440, %v1111, %v1109
          %v1114 = vmul.f32 %v1113, %v446
          %v1115 = vmul.f32 %v1112, %v450
          %1116 = vst [vmem:[#allocation2 + $0x10] sm:$0xf] %v1114
          %1117 = vst [vmem:[#allocation2 + $0x18] sm:$0xf] %v1115
          %1118 = vrot.lane.b32.xlu0 %v1078, 1
          %v1119 = vpop.permute.xlu0 %1118
          %1120 = vrot.lane.b32.xlu0 %v1079, 1
          %v1121 = vpop.permute.xlu0 %1120
          %v1122 = vsel %vm459, %v1119, %v1121
          %v1123 = vsel %vm459, %v1121, %v1119
          %v1124 = vmul.f32 %v1123, %v465
          %v1125 = vmul.f32 %v1122, %v469
          %v1128 = vrot.slane %v1124, 4
          %v1129 = vrot.slane %v1125, 4
          %1132 = vst [vmem:[#allocation2 + $0x10] sm:$0xf0] %v1128
          %1133 = vst [vmem:[#allocation2 + $0x18] sm:$0xf0] %v1129
          %1134 = vst [vmem:[#allocation2 + $0x20] sm:$0xf] %v1078
          %1135 = vst [vmem:[#allocation2 + $0x28] sm:$0xf] %v1079
          %1136 = vrot.lane.b32.xlu0 %v1078, 127
          %v1137 = vpop.permute.xlu0 %1136
          %1138 = vrot.lane.b32.xlu0 %v1079, 127
          %v1139 = vpop.permute.xlu0 %1138
          %v1140 = vsel %vm486, %v1137, %v1139
          %v1141 = vsel %vm486, %v1139, %v1137
          %v1142 = vmul.f32 %v1140, %v492
          %v1143 = vmul.f32 %v1141, %v496
          %v1146 = vrot.slane %v1142, 4
          %v1147 = vrot.slane %v1143, 4
          %1150 = vst [vmem:[#allocation2 + $0x20] sm:$0xf0] %v1146
          %1151 = vst [vmem:[#allocation2 + $0x28] sm:$0xf0] %v1147
          %1152 = vrot.lane.b32.xlu0 %v1078, 113
          %v1153 = vpop.permute.xlu0 %1152
          %1154 = vrot.lane.b32.xlu0 %v1079, 113
          %v1155 = vpop.permute.xlu0 %1154
          %v1156 = vsel %vm511, %v1153, %v1155
          %v1157 = vsel %vm511, %v1155, %v1153
          %v1158 = vmul.f32 %v1156, %v517
          %v1159 = vmul.f32 %v1157, %v521
          %1160 = vst [vmem:[#allocation2 + $0x30] sm:$0xf] %v1158
          %1161 = vst [vmem:[#allocation2 + $0x38] sm:$0xf] %v1159
          %1162 = vrot.lane.b32.xlu0 %v1078, 112
          %v1163 = vpop.permute.xlu0 %1162
          %1164 = vrot.lane.b32.xlu0 %v1079, 112
          %v1165 = vpop.permute.xlu0 %1164
          %v1166 = vsel %vm530, %v1163, %v1165
          %v1167 = vsel %vm530, %v1165, %v1163
          %v1168 = vmul.f32 %v1166, %v536
          %v1169 = vmul.f32 %v1167, %v540
          %v1172 = vrot.slane %v1168, 4
          %v1173 = vrot.slane %v1169, 4
          %1176 = vst [vmem:[#allocation2 + $0x30] sm:$0xf0] %v1172
          %1177 = vst [vmem:[#allocation2 + $0x38] sm:$0xf0] %v1173
          %1178 = vrot.lane.b32.xlu0 %v1078, 111
          %v1179 = vpop.permute.xlu0 %1178
          %1180 = vrot.lane.b32.xlu0 %v1079, 111
          %v1181 = vpop.permute.xlu0 %1180
          %v1182 = vsel %vm555, %v1179, %v1181
          %v1183 = vsel %vm555, %v1181, %v1179
          %v1184 = vmul.f32 %v1182, %v561
          %v1185 = vmul.f32 %v1183, %v565
          %1186 = vst [vmem:[#allocation2 + $0x40] sm:$0xf] %v1184
          %1187 = vst [vmem:[#allocation2 + $0x48] sm:$0xf] %v1185
          %v1188 = vld [vmem:[#allocation2] sm:$0xff]
          %v1189 = vld [vmem:[#allocation2 + $0x8] sm:$0xff]
          %v1190 = vld [vmem:[#allocation2 + $0x10] sm:$0xff]
          %v1191 = vld [vmem:[#allocation2 + $0x18] sm:$0xff]
          %v1192 = vld [vmem:[#allocation2 + $0x20] sm:$0xff]
          %v1193 = vld [vmem:[#allocation2 + $0x28] sm:$0xff]
          %v1194 = vld [vmem:[#allocation2 + $0x30] sm:$0xff]
          %v1195 = vld [vmem:[#allocation2 + $0x38] sm:$0xff]
          %v1196 = vld [vmem:[#allocation2 + $0x40] sm:$0xf]
          %v1197 = vld [vmem:[#allocation2 + $0x48] sm:$0xf]
          %v1199 = vsel %vm587, %v1081, 0
          %v1202 = vsel %vm591, %v1196, 0
          %v1205 = vsel %vm591, %v1197, 0
          %1207 = vmatprep.subr.mxu0 %v1189
          %1208 = vmatpush1.msra.mxu0 %v1188
          %1209 = vmatprep.subr.mxu0 %v1191
          %1210 = vmatpush1.msra.mxu0 %v1190
          %1211 = vmatprep.subr.mxu0 %v1193
          %1212 = vmatpush1.msra.mxu0 %v1192
          %1213 = vmatprep.subr.mxu0 %v1195
          %1214 = vmatpush1.msra.mxu0 %v1194
          %1215 = vmatprep.subr.mxu0 %v1205
          %1216 = vmatpush1.msra.mxu0 %v1202
          %1217 = vmatprep.subr.mxu0 0.0
          %1218 = vmatpush1.msra.mxu0 0.0
          %1219 = vmatprep.subr.mxu0 0.0
          %1220 = vmatpush1.msra.mxu0 0.0
          %1221 = vmatprep.subr.mxu0 0.0
          %1222 = vmatpush1.msra.mxu0 0.0
          %1223 = vmatprep.subr.mxu0 0.0
          %1224 = vmatpush1.msra.mxu0 0.0
          %1225 = vmatprep.subr.mxu0 0.0
          %1226 = vmatpush1.msra.mxu0 0.0
          %1227 = vmatprep.subr.mxu0 0.0
          %1228 = vmatpush1.msra.mxu0 0.0
          %1229 = vmatprep.subr.mxu0 0.0
          %1230 = vmatpush1.msra.mxu0 0.0
          %1231 = vmatprep.subr.mxu0 0.0
          %1232 = vmatpush1.msra.mxu0 0.0
          %1233 = vmatprep.subr.mxu0 0.0
          %1234 = vmatpush1.msra.mxu0 0.0
          %1235 = vmatprep.subr.mxu0 0.0
          %1236 = vmatpush1.msra.mxu0 0.0
          %1237 = vmatprep.subr.mxu0 0.0
          %1238 = vmatpush1.msra.mxu0 0.0
          %1239 = vmatprep.subr.mxu0 0.0
          %1240 = vmatpush1.msra.mxu0 0.0
          %1241 = vmatprep.subr.mxu0 0.0
          %1242 = vmatpush1.msra.mxu0 0.0
          %1243 = vmatprep.subr.mxu0 0.0
          %1244 = vmatpush1.msra.mxu0 0.0
          %1245 = vmatprep.subr.mxu0 0.0
          %1246 = vmatpush1.msra.mxu0 0.0
          %1247 = vmatprep.subr.mxu0 0.0
          %1248 = vmatpush1.msra.mxu0 0.0
          %1249 = vmatprep.subr.mxu0 0.0
          %1250 = vmatpush1.msra.mxu0 0.0
          %1251 = vmatprep.subr.mxu0 0.0
          %1252 = vmatpush1.msra.mxu0 0.0
          %1253 = vmatprep.subr.mxu0 0.0
          %1254 = vmatpush1.msra.mxu0 0.0
          %1255 = vmatprep.subr.mxu0 0.0
          %1256 = vmatpush1.msra.mxu0 0.0
          %1257 = vmatprep.subr.mxu0 0.0
          %1258 = vmatpush1.msra.mxu0 0.0
          %1259 = vmatprep.subr.mxu0 0.0
          %1260 = vmatpush1.msra.mxu0 0.0
          %1261 = vmatprep.subr.mxu0 0.0
          %1262 = vmatpush1.msra.mxu0 0.0
          %1263 = vmatprep.subr.mxu0 0.0
          %1264 = vmatpush1.msra.mxu0 0.0
          %1265 = vmatprep.subr.mxu0 0.0
          %1266 = vmatpush1.msra.mxu0 0.0
          %1267 = vmatprep.subr.mxu0 0.0
          %1268 = vmatpush1.msra.mxu0 0.0
          %1269 = vmatprep.subr.mxu0 0.0
          %1270 = vmatpush1.msra.mxu0 0.0
          %1271 = vmatprep.mubr.f32.mxu0 0.0
          %1272 = vmatmul.mubr.f32.gmra.mrb[0].mxu0 %v1199
          %v1273 = vpop.f32.mrb[0].mxu0
          %v1274 = vadd.f32 0.0, %v1273
          %v1275 = vpop.f32.mrb[0].mxu0
          %v1276 = vadd.f32 0.0, %v1275
          %1277 = vdwg.mxu0
          %v1278 = vmul.f32 %v1274, 0.1
          %v1279 = vmul.f32 %v1276, 0.1
          %v1282 = vrot.slane %v1278, 4
          %v1283 = vrot.slane %v1279, 4
          %v1286 = vsub.f32 %v379, %v1282
          %v1287 = vsub.f32 %v380, %v1283
        $region73: #{tpu_custom_call.1} parent=51 // loop_footer
          %s376 = sadd.s32 1, %s372
        $region74: #{tpu_custom_call.1} parent=51 // loop_footer_branch
          %371 = sbr.rel target = $region70
        $region75: #{tpu_custom_call.1} parent=51 // loop_exit
          _
        %1288 = vst [vmem:[%s357] sm:$0xf] %v377
        %1289 = vst [vmem:[%s357 + $0x8] sm:$0xf] %v378
        %1290 = vst [vmem:[%s357] sm:$0xf0] %v379
        %1291 = vst [vmem:[%s357 + $0x8] sm:$0xf0] %v380
        %s1292 = sand.u32 %s206, 1
        %s1293 = scalar_lea.sflag [#allocation5], %s1292
        %s1294 = sand.u32 %s206, 1
        %s1295 = smul.addr %s1294, 16
        %s1296 = scalar_lea.vmem [#allocation11], %s1295
        // Predicated region
        $region76: #{tpu_custom_call.1} parent=51 // pred_check
          %p1297 = pneg %p216
        $region77: #{tpu_custom_call.1} parent=51 // pred_check_branch
          %1299 = sbr.rel (%p1297) target = $region79
        $region78: #{tpu_custom_call.1} parent=51 // pred_region
          %s1301 = ssub.s32 256, 256
          %1302 = vsyncadd %s1293, %s1301
          %s1303 = smul.addr %s25, 2
          %s1304 = smul.addr %s1303, 128
          %s1305 = scalar_lea.hbm %s8, %s1304
          %s1307 = sshll.u32 %s1296, 4
          %s1308 = int_to_ptr.vmem [resolvable:$true] %s1307
          %1310 = dma.vmem_to_hbm [thread:$0]  %s1308, 256, %s1305, %s1293
        $region79: #{tpu_custom_call.1} parent=51 // pred_fallthru
          _
      $region52: #{tpu_custom_call.1} parent=5 // pred_fallthru
        _
      %p1311 = scmp.le.s32.totalorder 2, %s20
      // Predicated region
      $region80: #{tpu_custom_call.1} parent=5 // pred_check
        %p1312 = pneg %p1311
      $region81: #{tpu_custom_call.1} parent=5 // pred_check_branch
        %1314 = sbr.rel (%p1312) target = $region83
      $region82: #{tpu_custom_call.1} parent=5 // pred_region
        %s1315 = ssub.s32 %s20, 2
        // Predicated region
        $region84: #{tpu_custom_call.1} parent=82 // pred_check
          %p1316 = pneg %p222
        $region85: #{tpu_custom_call.1} parent=82 // pred_check_branch
          %1318 = sbr.rel (%p1316) target = $region87
        $region86: #{tpu_custom_call.1} parent=82 // pred_region
          %s1319 = sand.u32 %s207, 1
          %s1320 = scalar_lea.sflag [#allocation5], %s1319
          %s1321 = sand.u32 %s207, 1
          %s1322 = smul.addr %s1321, 16
          %s1323 = scalar_lea.vmem [#allocation11], %s1322
          %1324 = dma.done %s1320, 256
        $region87: #{tpu_custom_call.1} parent=82 // pred_fallthru
          _
      $region83: #{tpu_custom_call.1} parent=5 // pred_fallthru
        _
    $region6: #{tpu_custom_call.1} parent=1 // loop_footer
      %s24 = sadd.s32 1, %s20
    $region7: #{tpu_custom_call.1} parent=1 // loop_footer_branch
      %19 = sbr.rel target = $region3
    $region8: #{tpu_custom_call.1} parent=1 // loop_exit
      _
    %1325 = vsyncpa [#allocation4], 1
    %s1326 = scalar_lea.sflag [#allocation4], 1
    %1327 = vsyncpa %s1326, 1
    %1328 = vsyncpa [#allocation7], 1
    %1329 = vsyncpa [#allocation10], 1
    %1330 = vsyncpa [#allocation5], 1
    %s1331 = scalar_lea.sflag [#allocation5], 1
    %1332 = vsyncpa %s1331, 1

</llo_original>
